<compile_context>
chip_gen: v7x
topology: tpu7x:2x2x1
jax: 0.10.0
libtpu: 0.0.40
codegen_flags: <defaults>
</compile_context>

<pallas_src>
import functools

import jax
import jax.numpy as jnp
from jax.experimental import pallas as pl
from jax.experimental.pallas import tpu as pltpu

LN_EPS = 1e-5          # TransformerEngine default layernorm_epsilon
MASK_NEG = -1e9        # additive value for masked attention positions
# TODO(synk): -1e9 (not -inf) means a fully-masked query row degrades to a uniform
# softmax instead of NaN; fine as long as every row has at least one valid key.


def _gelu_tanh(x):
    # TransformerEngine 'gelu' (tanh approximation)
    c = 0.7978845608028654  # sqrt(2/pi)
    return 0.5 * x * (1.0 + jnp.tanh(c * (x + 0.044715 * x * x * x)))


def _layernorm(x, gamma, beta):
    mu = jnp.mean(x, axis=-1, keepdims=True)
    var = jnp.mean(jnp.square(x - mu), axis=-1, keepdims=True)
    return (x - mu) * jax.lax.rsqrt(var + LN_EPS) * gamma + beta


def _fused_processor_kernel(num_heads, q_tile,
                            mask_ref, x_ref,
                            ln1_g_ref, ln1_b_ref,
                            wqkv_ref, bqkv_ref, wo_ref, bo_ref,
                            ln2_g_ref, ln2_b_ref,
                            w1_ref, b1_ref, w2_ref, b2_ref,
                            out_ref,
                            addmask_scr, qkv_scr):
    layer = pl.program_id(0)
    n, d = out_ref.shape
    hd = d // num_heads
    n_qt = n // q_tile
    bf16, f32 = jnp.bfloat16, jnp.float32

    # Layer 0 only: load the residual stream into the resident (constant-index)
    # output block and widen the int8 mask into an additive f32 bias exactly once.
    @pl.when(layer == 0)
    def _():
        out_ref[...] = x_ref[...].astype(f32)
        addmask_scr[...] = mask_ref[...].astype(f32) * MASK_NEG

    x = out_ref[...]                                            # [N, D] f32 residual

    # ---- pre-LN + ONE lane-dense fused QKV projection for the whole layer ----
    xn = _layernorm(x, ln1_g_ref[...], ln1_b_ref[...])          # [N, D] f32
    qkv = jnp.dot(xn.astype(bf16), wqkv_ref[...],
                  preferred_element_type=f32) + bqkv_ref[...]   # [N, 3D] f32
    qkv_scr[...] = qkv.astype(bf16)        # park Q (pre-scaled) | K | V in VMEM

    # ---- per-query-tile attention + MLP (bounds the [tq, N] score working set) ----
    def q_tile_body(qs):
        x_t = out_ref[pl.ds(qs, q_tile), :]                     # [tq, D] f32 (pre-update)
        mask_t = addmask_scr[pl.ds(qs, q_tile), :]              # [tq, N] f32
        q_t = qkv_scr[pl.ds(qs, q_tile), 0:d]                   # [tq, D] bf16 (scaled)

        o_heads = []
        for h in range(num_heads):                              # static, small (H=4)
            k_h = qkv_scr[:, d + h * hd:d + (h + 1) * hd]           # [N, hd] bf16
            v_h = qkv_scr[:, 2 * d + h * hd:2 * d + (h + 1) * hd]   # [N, hd] bf16
            s = jnp.einsum('qd,kd->qk', q_t[:, h * hd:(h + 1) * hd], k_h,
                           preferred_element_type=f32)          # [tq, N] f32
            s = s + mask_t
            s = s - jnp.max(s, axis=-1, keepdims=True)
            p = jnp.exp(s)
            p = p * pl.reciprocal(jnp.sum(p, axis=-1, keepdims=True), approx=True)
            o_heads.append(jnp.dot(p.astype(bf16), v_h,
                                   preferred_element_type=f32))  # [tq, hd] f32

        # Lane concat of heads -> single lane-dense output projection; the head
        # reduction is folded into the D-long MXU contraction (no [H,N,D] interm.).
        ctx = jnp.concatenate(o_heads, axis=-1).astype(bf16)    # [tq, D]
        attn = jnp.dot(ctx, wo_ref[...],
                       preferred_element_type=f32) + bo_ref[...]
        x1 = x_t + attn                                          # residual 1 (f32)

        # ---- MLP branch (pre-LN), fused into the same query tile ----
        x1n = _layernorm(x1, ln2_g_ref[...], ln2_b_ref[...])
        h1 = jnp.dot(x1n.astype(bf16), w1_ref[...],
                     preferred_element_type=f32) + b1_ref[...]
        h1 = _gelu_tanh(h1)                                      # f32
        mlp = jnp.dot(h1.astype(bf16), w2_ref[...],
                      preferred_element_type=f32) + b2_ref[...]

        out_ref[pl.ds(qs, q_tile), :] = x1 + mlp                 # residual 2, stays in VMEM

    if n_qt <= 8:
        # Static unroll: all slice offsets are Python ints (most robust lowering).
        for qi in range(n_qt):
            q_tile_body(qi * q_tile)
    else:
        def body(qi, carry):
            q_tile_body(pl.multiple_of(qi * q_tile, q_tile))
            return carry
        jax.lax.fori_loop(0, n_qt, body, 0)


def _full_spec(a):
    zeros = (0,) * a.ndim
    return pl.BlockSpec(a.shape, lambda l, z=zeros: z)


def _per_layer_spec(a):
    zeros = (0,) * (a.ndim - 1)
    return pl.BlockSpec((None,) + a.shape[1:], lambda l, z=zeros: (l,) + z)


def _pick_q_tile(n):
    if n <= 256:
        return n
    for t in (512, 256, 128, 64, 32, 16, 8):
        if n % t == 0:
            return t
    return n  # TODO(synk): pad / ragged handling when N has no small divisor


def _pick_vmem_limit():
    """Per-generation VMEM limit with headroom (v7x has only 64 MiB / TC)."""
    mib = 1024 * 1024
    try:
        cap = int(getattr(pltpu.get_tpu_info(), "vmem_capacity_bytes", 0)) or 128 * mib
    except Exception:
        return 64 * mib                       # safe default
    if cap >= 128 * mib:
        return 100 * mib                      # v5e / v6e
    return max(cap - 12 * mib, 32 * mib)      # v7x-class: leave compiler headroom


def graphcast_processor_graph_transformer(nfeat, attention_mask_bool,
                                          stacked_params, num_attention_heads,
                                          q_tile=None):
    """Forward pass [N, D] -> [N, D] (the unsqueeze/squeeze of the batch=1 dim is a
    no-op in this layout). All processor layers run inside one pallas_call."""
    n, d = nfeat.shape
    p = stacked_params
    num_layers = p["wqkv"].shape[0]
    ffn_hidden = p["w1"].shape[-1]
    if q_tile is None:
        q_tile = _pick_q_tile(n)
    assert n % q_tile == 0, "N must be divisible by the query tile"

    mask_i8 = attention_mask_bool.astype(jnp.int8)            # True == masked out
    x_f32 = nfeat.astype(jnp.float32)

    args = (mask_i8, x_f32,
            p["ln1_g"], p["ln1_b"], p["wqkv"], p["bqkv"], p["wo"], p["bo"],
            p["ln2_g"], p["ln2_b"], p["w1"], p["b1"], p["w2"], p["b2"])
    in_specs = [_full_spec(mask_i8), _full_spec(x_f32)]
    in_specs += [_per_layer_spec(a) for a in args[2:]]

    # Advisory cost estimate for the fused call.
    flops_per_layer = (2 * n * d * 3 * d          # fused QKV projection
                       + 2 * n * n * d            # Q.K^T (summed over heads)
                       + 2 * n * n * d            # P.V
                       + 2 * n * d * d            # output projection
                       + 2 * n * d * ffn_hidden   # MLP up
                       + 2 * n * ffn_hidden * d)  # MLP down
    transc_per_layer = num_attention_heads * n * n + n * ffn_hidden
    bytes_weights = sum(int(a.size) * a.dtype.itemsize for a in args[2:])
    cost = pl.CostEstimate(
        flops=int(num_layers * flops_per_layer),
        transcendentals=int(num_layers * transc_per_layer),
        bytes_accessed=int(mask_i8.size + 2 * n * d * 4 + bytes_weights))

    kernel = functools.partial(_fused_processor_kernel, num_attention_heads, q_tile)
    return pl.pallas_call(
        kernel,
        out_shape=jax.ShapeDtypeStruct((n, d), jnp.float32),
        grid_spec=pltpu.PrefetchScalarGridSpec(
            num_scalar_prefetch=0,
            grid=(num_layers,),
            in_specs=in_specs,
            out_specs=pl.BlockSpec((n, d), lambda l: (0, 0)),
            scratch_shapes=[pltpu.VMEM((n, n), jnp.float32),        # additive mask
                            pltpu.VMEM((n, 3 * d), jnp.bfloat16)],  # fused Q|K|V
        ),
        compiler_params=pltpu.CompilerParams(
            dimension_semantics=("arbitrary",),   # layers carry state -> sequential
            vmem_limit_bytes=_pick_vmem_limit()),
        cost_estimate=cost,
    )(*args)


def init_layer_params(key, d_model, ffn_hidden):
    """Deterministic synthetic parameter init (shapes match te TransformerLayer).
    Weight matrices are [in_features, out_features]; biases [1, out_features]."""
    ks = jax.random.split(key, 6)
    s_d = 0.1 / jnp.sqrt(jnp.float32(d_model))      # fan-in d_model
    s_f = 0.1 / jnp.sqrt(jnp.float32(ffn_hidden))   # fan-in ffn_hidden
    f32 = jnp.float32
    return {
        "ln1_g": jnp.ones((1, d_model), f32),
        "ln1_b": jnp.zeros((1, d_model), f32),
        "wq": jax.random.normal(ks[0], (d_model, d_model), f32) * s_d,
        "bq": jnp.zeros((1, d_model), f32),
        "wk": jax.random.normal(ks[1], (d_model, d_model), f32) * s_d,
        "bk": jnp.zeros((1, d_model), f32),
        "wv": jax.random.normal(ks[2], (d_model, d_model), f32) * s_d,
        "bv": jnp.zeros((1, d_model), f32),
        "wo": jax.random.normal(ks[3], (d_model, d_model), f32) * s_d,
        "bo": jnp.zeros((1, d_model), f32),
        "ln2_g": jnp.ones((1, d_model), f32),
        "ln2_b": jnp.zeros((1, d_model), f32),
        "w1": jax.random.normal(ks[4], (d_model, ffn_hidden), f32) * s_d,
        "b1": jnp.zeros((1, ffn_hidden), f32),
        "w2": jax.random.normal(ks[5], (ffn_hidden, d_model), f32) * s_f,
        "b2": jnp.zeros((1, d_model), f32),
    }


def stack_layer_params(layer_params, num_heads):
    """Stack per-layer params on a leading L axis in the kernel's layout:
      * wq|wk|wv fused column-wise into one lane-dense [D, 3D] bf16 matrix with
        1/sqrt(head_dim) folded into the Q columns; biases fused into [1, 3D] f32;
      * wo / w1 / w2 stay plain 2-D bf16 matrices (head reduction happens inside
        the D-long out-projection contraction);
      * LayerNorm params and biases stay f32."""
    d_model = layer_params[0]["wq"].shape[0]
    hd = d_model // num_heads
    scale = 1.0 / jnp.sqrt(jnp.float32(hd))
    bf16, f32 = jnp.bfloat16, jnp.float32

    def stack(name, dtype=f32):
        return jnp.stack([lp[name] for lp in layer_params], 0).astype(dtype)

    wqkv = jnp.stack([jnp.concatenate([lp["wq"] * scale, lp["wk"], lp["wv"]], axis=-1)
                      for lp in layer_params], 0).astype(bf16)            # [L, D, 3D]
    bqkv = jnp.stack([jnp.concatenate([lp["bq"] * scale, lp["bk"], lp["bv"]], axis=-1)
                      for lp in layer_params], 0).astype(f32)             # [L, 1, 3D]
    return {
        "ln1_g": stack("ln1_g"), "ln1_b": stack("ln1_b"),
        "wqkv": wqkv, "bqkv": bqkv,
        "wo": stack("wo", bf16), "bo": stack("bo"),
        "ln2_g": stack("ln2_g"), "ln2_b": stack("ln2_b"),
        "w1": stack("w1", bf16), "b1": stack("b1"),
        "w2": stack("w2", bf16), "b2": stack("b2"),
    }


def _reference_forward(nfeat, mask_bool, layer_params, num_heads):
    """Pure-JAX reference mirroring the kernel's numerics (bf16 matmul operands,
    f32 accumulation) for a tolerance smoke test."""
    f32, bf16 = jnp.float32, jnp.bfloat16

    def bdot(a, b):
        return jnp.dot(a.astype(bf16), b.astype(bf16), preferred_element_type=f32)

    def ln(x, g, b):
        mu = jnp.mean(x, -1, keepdims=True)
        var = jnp.mean(jnp.square(x - mu), -1, keepdims=True)
        return (x - mu) * jax.lax.rsqrt(var + LN_EPS) * g + b

    n, d = nfeat.shape
    hd = d // num_heads
    scale = 1.0 / jnp.sqrt(jnp.float32(hd))
    addmask = jnp.where(mask_bool, jnp.float32(MASK_NEG), 0.0)
    x = nfeat.astype(f32)
    for p in layer_params:
        xn = ln(x, p["ln1_g"], p["ln1_b"])
        q = bdot(xn, p["wq"]) + p["bq"]
        k = bdot(xn, p["wk"]) + p["bk"]
        v = bdot(xn, p["wv"]) + p["bv"]
        o_heads = []
        for h in range(num_heads):
            sl = slice(h * hd, (h + 1) * hd)
            s = bdot(q[:, sl] * scale, k[:, sl].T) + addmask
            s = s - jnp.max(s, -1, keepdims=True)
            pr = jnp.exp(s)
            pr = pr / jnp.sum(pr, -1, keepdims=True)
            o_heads.append(bdot(pr, v[:, sl]))
        ctx = jnp.concatenate(o_heads, axis=-1)
        x1 = x + bdot(ctx, p["wo"]) + p["bo"]
        x1n = ln(x1, p["ln2_g"], p["ln2_b"])
        h1 = _gelu_tanh(bdot(x1n, p["w1"]) + p["b1"])
        x = x1 + bdot(h1, p["w2"]) + p["b2"]
    return x


if __name__ == "__main__":
    # Small, module-consistent shapes:
    #   N nodes = 16 (sequence), input_dim_nodes = 32, hidden_dim (ffn) = 32,
    #   num_attention_heads = 4 (head_dim = 8), processor_layers = 3.
    N_NODES = 16
    D_MODEL = 32
    FFN_HIDDEN = 32
    NUM_HEADS = 4
    NUM_LAYERS = 3

    root = jax.random.PRNGKey(0)
    k_in, k_params = jax.random.split(root)

    nfeat = jax.random.normal(k_in, (N_NODES, D_MODEL), jnp.float32)

    # Boolean attention mask: True == masked out (TE 'arbitrary' semantics).
    # Band mask (attend within |i-j| <= 4) so every query row has valid keys.
    idx = jnp.arange(N_NODES)
    attention_mask = jnp.abs(idx[:, None] - idx[None, :]) > 4   # bool [N, N]

    layer_keys = jax.random.split(k_params, NUM_LAYERS)
    layer_params = [init_layer_params(layer_keys[i], D_MODEL, FFN_HIDDEN)
                    for i in range(NUM_LAYERS)]
    stacked_params = stack_layer_params(layer_params, NUM_HEADS)

    out = graphcast_processor_graph_transformer(nfeat, attention_mask,
                                                stacked_params, NUM_HEADS)
    out = jax.block_until_ready(out)

    assert out.shape == (N_NODES, D_MODEL)
    assert bool(jnp.all(jnp.isfinite(out)))

    ref = _reference_forward(nfeat, attention_mask, layer_params, NUM_HEADS)
    max_err = float(jnp.max(jnp.abs(out - ref)))
    assert max_err < 5e-2, f"kernel deviates from reference: max_err={max_err}"
    print("KERNEL_OK")
</pallas_src>

<mosaic_0001>
module attributes {stable_mosaic.version = 11 : i64} {
  func.func @_fused_processor_kernel(%arg0: i32, %arg1: memref<16x16xi8, #tpu.memory_space<vmem>>, %arg2: memref<16x32xf32, #tpu.memory_space<vmem>>, %arg3: memref<1x1x32xf32, #tpu.memory_space<vmem>>, %arg4: memref<1x1x32xf32, #tpu.memory_space<vmem>>, %arg5: memref<1x32x96xbf16, #tpu.memory_space<vmem>>, %arg6: memref<1x1x96xf32, #tpu.memory_space<vmem>>, %arg7: memref<1x32x32xbf16, #tpu.memory_space<vmem>>, %arg8: memref<1x1x32xf32, #tpu.memory_space<vmem>>, %arg9: memref<1x1x32xf32, #tpu.memory_space<vmem>>, %arg10: memref<1x1x32xf32, #tpu.memory_space<vmem>>, %arg11: memref<1x32x32xbf16, #tpu.memory_space<vmem>>, %arg12: memref<1x1x32xf32, #tpu.memory_space<vmem>>, %arg13: memref<1x32x32xbf16, #tpu.memory_space<vmem>>, %arg14: memref<1x1x32xf32, #tpu.memory_space<vmem>>, %arg15: memref<16x32xf32, #tpu.memory_space<vmem>>, %arg16: memref<16x16xf32, #tpu.memory_space<vmem>>, %arg17: memref<16x96xbf16, #tpu.memory_space<vmem>>) attributes {dimension_semantics = [#tpu.dimension_semantics<arbitrary>], iteration_bounds = array<i64: 3>, scalar_prefetch = 0 : i64, scratch_operands = 2 : i64, tpu.core_type = #tpu.core_type<tc>, window_params = [{pipeline_mode = #tpu.pipeline_mode<synchronous>, transform_indices = @transform_0, window_bounds = array<i64: 16, 16>}, {pipeline_mode = #tpu.pipeline_mode<synchronous>, transform_indices = @transform_1, window_bounds = array<i64: 16, 32>}, {transform_indices = @transform_2, window_bounds = array<i64: 1, 1, 32>}, {transform_indices = @transform_3, window_bounds = array<i64: 1, 1, 32>}, {transform_indices = @transform_4, window_bounds = array<i64: 1, 32, 96>}, {transform_indices = @transform_5, window_bounds = array<i64: 1, 1, 96>}, {transform_indices = @transform_6, window_bounds = array<i64: 1, 32, 32>}, {transform_indices = @transform_7, window_bounds = array<i64: 1, 1, 32>}, {transform_indices = @transform_8, window_bounds = array<i64: 1, 1, 32>}, {transform_indices = @transform_9, window_bounds = array<i64: 1, 1, 32>}, {transform_indices = @transform_10, window_bounds = array<i64: 1, 32, 32>}, {transform_indices = @transform_11, window_bounds = array<i64: 1, 1, 32>}, {transform_indices = @transform_12, window_bounds = array<i64: 1, 32, 32>}, {transform_indices = @transform_13, window_bounds = array<i64: 1, 1, 32>}, {pipeline_mode = #tpu.pipeline_mode<synchronous>, transform_indices = @transform_14, window_bounds = array<i64: 16, 32>}]} {
    %c0_i32 = arith.constant 0 : i32
    %0 = arith.cmpi eq, %arg0, %c0_i32 : i32
    %1 = arith.extui %0 : i1 to i32
    %c0_i32_0 = arith.constant 0 : i32
    %2 = arith.cmpi ne, %1, %c0_i32_0 : i32
    scf.if %2 {
      %c0_89 = arith.constant 0 : index
      %c0_90 = arith.constant 0 : index
      %178 = vector.load %arg2[%c0_89, %c0_90] : memref<16x32xf32, #tpu.memory_space<vmem>>, vector<16x32xf32>
      %c0_91 = arith.constant 0 : index
      %c0_92 = arith.constant 0 : index
      %179 = vector.load %arg15[%c0_91, %c0_92] : memref<16x32xf32, #tpu.memory_space<vmem>>, vector<16x32xf32>
      tpu.vector_store %arg15[%c0_91, %c0_92], %178 {strides = array<i32>} : memref<16x32xf32, #tpu.memory_space<vmem>>, vector<16x32xf32>,
      %c0_93 = arith.constant 0 : index
      %c0_94 = arith.constant 0 : index
      %180 = vector.load %arg1[%c0_93, %c0_94] : memref<16x16xi8, #tpu.memory_space<vmem>>, vector<16x16xi8>
      %181 = arith.sitofp %180 : vector<16x16xi8> to vector<16x16xf32>
      %cst_95 = arith.constant -1.000000e+09 : f32
      %182 = vector.broadcast %cst_95 : f32 to vector<16x16xf32>
      %183 = arith.mulf %181, %182 : vector<16x16xf32>
      %c0_96 = arith.constant 0 : index
      %c0_97 = arith.constant 0 : index
      %184 = vector.load %arg16[%c0_96, %c0_97] : memref<16x16xf32, #tpu.memory_space<vmem>>, vector<16x16xf32>
      tpu.vector_store %arg16[%c0_96, %c0_97], %183 {strides = array<i32>} : memref<16x16xf32, #tpu.memory_space<vmem>>, vector<16x16xf32>,
    } else {
    }
    %c0 = arith.constant 0 : index
    %c0_1 = arith.constant 0 : index
    %3 = vector.load %arg15[%c0, %c0_1] : memref<16x32xf32, #tpu.memory_space<vmem>>, vector<16x32xf32>
    %c0_2 = arith.constant 0 : index
    %c0_3 = arith.constant 0 : index
    %c0_4 = arith.constant 0 : index
    %4 = vector.load %arg3[%c0_2, %c0_3, %c0_4] : memref<1x1x32xf32, #tpu.memory_space<vmem>>, vector<1x1x32xf32>
    %5 = vector.shape_cast %4 : vector<1x1x32xf32> to vector<1x32xf32>
    %c0_5 = arith.constant 0 : index
    %c0_6 = arith.constant 0 : index
    %c0_7 = arith.constant 0 : index
    %6 = vector.load %arg4[%c0_5, %c0_6, %c0_7] : memref<1x1x32xf32, #tpu.memory_space<vmem>>, vector<1x1x32xf32>
    %7 = vector.shape_cast %6 : vector<1x1x32xf32> to vector<1x32xf32>
    %cst = arith.constant dense<0.000000e+00> : vector<16xf32>
    %8 = vector.multi_reduction <add>, %3, %cst [1] : vector<16x32xf32> to vector<16xf32>
    %9 = vector.shape_cast %8 : vector<16xf32> to vector<16x1xf32>
    %cst_8 = arith.constant 3.200000e+01 : f32
    %10 = vector.broadcast %cst_8 : f32 to vector<16x1xf32>
    %11 = arith.divf %9, %10 : vector<16x1xf32>
    %12 = vector.broadcast %11 : vector<16x1xf32> to vector<16x32xf32>
    %13 = arith.subf %3, %12 : vector<16x32xf32>
    %14 = arith.mulf %13, %13 : vector<16x32xf32>
    %cst_9 = arith.constant dense<0.000000e+00> : vector<16xf32>
    %15 = vector.multi_reduction <add>, %14, %cst_9 [1] : vector<16x32xf32> to vector<16xf32>
    %16 = vector.shape_cast %15 : vector<16xf32> to vector<16x1xf32>
    %cst_10 = arith.constant 3.200000e+01 : f32
    %17 = vector.broadcast %cst_10 : f32 to vector<16x1xf32>
    %18 = arith.divf %16, %17 : vector<16x1xf32>
    %19 = vector.broadcast %11 : vector<16x1xf32> to vector<16x32xf32>
    %20 = arith.subf %3, %19 : vector<16x32xf32>
    %cst_11 = arith.constant 9.99999974E-6 : f32
    %21 = vector.broadcast %cst_11 : f32 to vector<16x1xf32>
    %22 = arith.addf %18, %21 : vector<16x1xf32>
    %23 = math.rsqrt %22 : vector<16x1xf32>
    %24 = vector.broadcast %23 : vector<16x1xf32> to vector<16x32xf32>
    %25 = arith.mulf %20, %24 : vector<16x32xf32>
    %26 = vector.broadcast %5 : vector<1x32xf32> to vector<16x32xf32>
    %27 = arith.mulf %25, %26 : vector<16x32xf32>
    %28 = vector.broadcast %7 : vector<1x32xf32> to vector<16x32xf32>
    %29 = arith.addf %27, %28 : vector<16x32xf32>
    %30 = arith.truncf %29 : vector<16x32xf32> to vector<16x32xbf16>
    %c0_12 = arith.constant 0 : index
    %c0_13 = arith.constant 0 : index
    %c0_14 = arith.constant 0 : index
    %31 = vector.load %arg5[%c0_12, %c0_13, %c0_14] : memref<1x32x96xbf16, #tpu.memory_space<vmem>>, vector<1x32x96xbf16>
    %32 = vector.shape_cast %31 : vector<1x32x96xbf16> to vector<32x96xbf16>
    %cst_15 = arith.constant dense<0.000000e+00> : vector<16x96xf32>
    %33 = tpu.matmul %30, %32, %cst_15 {dimension_numbers = #tpu.dot_dimension_numbers<[1], [0], [0], [1], [0, 0, 1, 1], [], []>} : vector<16x32xbf16>, vector<32x96xbf16>, vector<16x96xf32> -> vector<16x96xf32>
    %c0_16 = arith.constant 0 : index
    %c0_17 = arith.constant 0 : index
    %c0_18 = arith.constant 0 : index
    %34 = vector.load %arg6[%c0_16, %c0_17, %c0_18] : memref<1x1x96xf32, #tpu.memory_space<vmem>>, vector<1x1x96xf32>
    %35 = vector.shape_cast %34 : vector<1x1x96xf32> to vector<1x96xf32>
    %36 = vector.broadcast %35 : vector<1x96xf32> to vector<16x96xf32>
    %37 = arith.addf %33, %36 : vector<16x96xf32>
    %38 = arith.truncf %37 : vector<16x96xf32> to vector<16x96xbf16>
    %c0_19 = arith.constant 0 : index
    %c0_20 = arith.constant 0 : index
    %39 = vector.load %arg17[%c0_19, %c0_20] : memref<16x96xbf16, #tpu.memory_space<vmem>>, vector<16x96xbf16>
    tpu.vector_store %arg17[%c0_19, %c0_20], %38 {strides = array<i32>} : memref<16x96xbf16, #tpu.memory_space<vmem>>, vector<16x96xbf16>,
    %c0_21 = arith.constant 0 : index
    %c0_22 = arith.constant 0 : index
    %40 = vector.load %arg15[%c0_21, %c0_22] : memref<16x32xf32, #tpu.memory_space<vmem>>, vector<16x32xf32>
    %c0_23 = arith.constant 0 : index
    %c0_24 = arith.constant 0 : index
    %41 = vector.load %arg16[%c0_23, %c0_24] : memref<16x16xf32, #tpu.memory_space<vmem>>, vector<16x16xf32>
    %c0_25 = arith.constant 0 : index
    %c0_26 = arith.constant 0 : index
    %42 = vector.load %arg17[%c0_25, %c0_26] : memref<16x96xbf16, #tpu.memory_space<vmem>>, vector<16x32xbf16>
    %c0_27 = arith.constant 0 : index
    %c32 = arith.constant 32 : index
    %43 = vector.load %arg17[%c0_27, %c32] : memref<16x96xbf16, #tpu.memory_space<vmem>>, vector<16x8xbf16>
    %c0_28 = arith.constant 0 : index
    %c64 = arith.constant 64 : index
    %44 = vector.load %arg17[%c0_28, %c64] : memref<16x96xbf16, #tpu.memory_space<vmem>>, vector<16x8xbf16>
    %45 = vector.extract_strided_slice %42 {offsets = [0, 0], sizes = [16, 8], strides = [1, 1]} : vector<16x32xbf16> to vector<16x8xbf16>
    "tpu.trace_start"() <{level = 10 : i32, message = "qd,kd->qk"}> : () -> ()
    %cst_29 = arith.constant dense<0.000000e+00> : vector<16x16xf32>
    %46 = tpu.matmul %45, %43, %cst_29 {dimension_numbers = #tpu.dot_dimension_numbers<[1], [1], [0], [0], [0, 0, 1, 0], [], []>} : vector<16x8xbf16>, vector<16x8xbf16>, vector<16x16xf32> -> vector<16x16xf32>
    "tpu.trace_stop"() : () -> ()
    %47 = arith.addf %46, %41 : vector<16x16xf32>
    %cst_30 = arith.constant dense<0xFF800000> : vector<16xf32>
    %48 = vector.multi_reduction <maximumf>, %47, %cst_30 [1] : vector<16x16xf32> to vector<16xf32>
    %49 = vector.shape_cast %48 : vector<16xf32> to vector<16x1xf32>
    %50 = vector.broadcast %49 : vector<16x1xf32> to vector<16x16xf32>
    %51 = arith.subf %47, %50 : vector<16x16xf32>
    %52 = math.exp %51 : vector<16x16xf32>
    %cst_31 = arith.constant dense<0.000000e+00> : vector<16xf32>
    %53 = vector.multi_reduction <add>, %52, %cst_31 [1] : vector<16x16xf32> to vector<16xf32>
    %54 = vector.shape_cast %53 : vector<16xf32> to vector<16x1xf32>
    %55 = tpu.reciprocal %54 {approx = true} : vector<16x1xf32> -> vector<16x1xf32>
    %56 = vector.broadcast %55 : vector<16x1xf32> to vector<16x16xf32>
    %57 = arith.mulf %52, %56 : vector<16x16xf32>
    %58 = arith.truncf %57 : vector<16x16xf32> to vector<16x16xbf16>
    %cst_32 = arith.constant dense<0.000000e+00> : vector<16x8xf32>
    %59 = tpu.matmul %58, %44, %cst_32 {dimension_numbers = #tpu.dot_dimension_numbers<[1], [0], [0], [1], [0, 0, 1, 1], [], []>} : vector<16x16xbf16>, vector<16x8xbf16>, vector<16x8xf32> -> vector<16x8xf32>
    %c0_33 = arith.constant 0 : index
    %c40 = arith.constant 40 : index
    %60 = vector.load %arg17[%c0_33, %c40] : memref<16x96xbf16, #tpu.memory_space<vmem>>, vector<16x8xbf16>
    %c0_34 = arith.constant 0 : index
    %c72 = arith.constant 72 : index
    %61 = vector.load %arg17[%c0_34, %c72] : memref<16x96xbf16, #tpu.memory_space<vmem>>, vector<16x8xbf16>
    %62 = vector.extract_strided_slice %42 {offsets = [0, 8], sizes = [16, 8], strides = [1, 1]} : vector<16x32xbf16> to vector<16x8xbf16>
    "tpu.trace_start"() <{level = 10 : i32, message = "qd,kd->qk"}> : () -> ()
    %cst_35 = arith.constant dense<0.000000e+00> : vector<16x16xf32>
    %63 = tpu.matmul %62, %60, %cst_35 {dimension_numbers = #tpu.dot_dimension_numbers<[1], [1], [0], [0], [0, 0, 1, 0], [], []>} : vector<16x8xbf16>, vector<16x8xbf16>, vector<16x16xf32> -> vector<16x16xf32>
    "tpu.trace_stop"() : () -> ()
    %64 = arith.addf %63, %41 : vector<16x16xf32>
    %cst_36 = arith.constant dense<0xFF800000> : vector<16xf32>
    %65 = vector.multi_reduction <maximumf>, %64, %cst_36 [1] : vector<16x16xf32> to vector<16xf32>
    %66 = vector.shape_cast %65 : vector<16xf32> to vector<16x1xf32>
    %67 = vector.broadcast %66 : vector<16x1xf32> to vector<16x16xf32>
    %68 = arith.subf %64, %67 : vector<16x16xf32>
    %69 = math.exp %68 : vector<16x16xf32>
    %cst_37 = arith.constant dense<0.000000e+00> : vector<16xf32>
    %70 = vector.multi_reduction <add>, %69, %cst_37 [1] : vector<16x16xf32> to vector<16xf32>
    %71 = vector.shape_cast %70 : vector<16xf32> to vector<16x1xf32>
    %72 = tpu.reciprocal %71 {approx = true} : vector<16x1xf32> -> vector<16x1xf32>
    %73 = vector.broadcast %72 : vector<16x1xf32> to vector<16x16xf32>
    %74 = arith.mulf %69, %73 : vector<16x16xf32>
    %75 = arith.truncf %74 : vector<16x16xf32> to vector<16x16xbf16>
    %cst_38 = arith.constant dense<0.000000e+00> : vector<16x8xf32>
    %76 = tpu.matmul %75, %61, %cst_38 {dimension_numbers = #tpu.dot_dimension_numbers<[1], [0], [0], [1], [0, 0, 1, 1], [], []>} : vector<16x16xbf16>, vector<16x8xbf16>, vector<16x8xf32> -> vector<16x8xf32>
    %c0_39 = arith.constant 0 : index
    %c48 = arith.constant 48 : index
    %77 = vector.load %arg17[%c0_39, %c48] : memref<16x96xbf16, #tpu.memory_space<vmem>>, vector<16x8xbf16>
    %c0_40 = arith.constant 0 : index
    %c80 = arith.constant 80 : index
    %78 = vector.load %arg17[%c0_40, %c80] : memref<16x96xbf16, #tpu.memory_space<vmem>>, vector<16x8xbf16>
    %79 = vector.extract_strided_slice %42 {offsets = [0, 16], sizes = [16, 8], strides = [1, 1]} : vector<16x32xbf16> to vector<16x8xbf16>
    "tpu.trace_start"() <{level = 10 : i32, message = "qd,kd->qk"}> : () -> ()
    %cst_41 = arith.constant dense<0.000000e+00> : vector<16x16xf32>
    %80 = tpu.matmul %79, %77, %cst_41 {dimension_numbers = #tpu.dot_dimension_numbers<[1], [1], [0], [0], [0, 0, 1, 0], [], []>} : vector<16x8xbf16>, vector<16x8xbf16>, vector<16x16xf32> -> vector<16x16xf32>
    "tpu.trace_stop"() : () -> ()
    %81 = arith.addf %80, %41 : vector<16x16xf32>
    %cst_42 = arith.constant dense<0xFF800000> : vector<16xf32>
    %82 = vector.multi_reduction <maximumf>, %81, %cst_42 [1] : vector<16x16xf32> to vector<16xf32>
    %83 = vector.shape_cast %82 : vector<16xf32> to vector<16x1xf32>
    %84 = vector.broadcast %83 : vector<16x1xf32> to vector<16x16xf32>
    %85 = arith.subf %81, %84 : vector<16x16xf32>
    %86 = math.exp %85 : vector<16x16xf32>
    %cst_43 = arith.constant dense<0.000000e+00> : vector<16xf32>
    %87 = vector.multi_reduction <add>, %86, %cst_43 [1] : vector<16x16xf32> to vector<16xf32>
    %88 = vector.shape_cast %87 : vector<16xf32> to vector<16x1xf32>
    %89 = tpu.reciprocal %88 {approx = true} : vector<16x1xf32> -> vector<16x1xf32>
    %90 = vector.broadcast %89 : vector<16x1xf32> to vector<16x16xf32>
    %91 = arith.mulf %86, %90 : vector<16x16xf32>
    %92 = arith.truncf %91 : vector<16x16xf32> to vector<16x16xbf16>
    %cst_44 = arith.constant dense<0.000000e+00> : vector<16x8xf32>
    %93 = tpu.matmul %92, %78, %cst_44 {dimension_numbers = #tpu.dot_dimension_numbers<[1], [0], [0], [1], [0, 0, 1, 1], [], []>} : vector<16x16xbf16>, vector<16x8xbf16>, vector<16x8xf32> -> vector<16x8xf32>
    %c0_45 = arith.constant 0 : index
    %c56 = arith.constant 56 : index
    %94 = vector.load %arg17[%c0_45, %c56] : memref<16x96xbf16, #tpu.memory_space<vmem>>, vector<16x8xbf16>
    %c0_46 = arith.constant 0 : index
    %c88 = arith.constant 88 : index
    %95 = vector.load %arg17[%c0_46, %c88] : memref<16x96xbf16, #tpu.memory_space<vmem>>, vector<16x8xbf16>
    %96 = vector.extract_strided_slice %42 {offsets = [0, 24], sizes = [16, 8], strides = [1, 1]} : vector<16x32xbf16> to vector<16x8xbf16>
    "tpu.trace_start"() <{level = 10 : i32, message = "qd,kd->qk"}> : () -> ()
    %cst_47 = arith.constant dense<0.000000e+00> : vector<16x16xf32>
    %97 = tpu.matmul %96, %94, %cst_47 {dimension_numbers = #tpu.dot_dimension_numbers<[1], [1], [0], [0], [0, 0, 1, 0], [], []>} : vector<16x8xbf16>, vector<16x8xbf16>, vector<16x16xf32> -> vector<16x16xf32>
    "tpu.trace_stop"() : () -> ()
    %98 = arith.addf %97, %41 : vector<16x16xf32>
    %cst_48 = arith.constant dense<0xFF800000> : vector<16xf32>
    %99 = vector.multi_reduction <maximumf>, %98, %cst_48 [1] : vector<16x16xf32> to vector<16xf32>
    %100 = vector.shape_cast %99 : vector<16xf32> to vector<16x1xf32>
    %101 = vector.broadcast %100 : vector<16x1xf32> to vector<16x16xf32>
    %102 = arith.subf %98, %101 : vector<16x16xf32>
    %103 = math.exp %102 : vector<16x16xf32>
    %cst_49 = arith.constant dense<0.000000e+00> : vector<16xf32>
    %104 = vector.multi_reduction <add>, %103, %cst_49 [1] : vector<16x16xf32> to vector<16xf32>
    %105 = vector.shape_cast %104 : vector<16xf32> to vector<16x1xf32>
    %106 = tpu.reciprocal %105 {approx = true} : vector<16x1xf32> -> vector<16x1xf32>
    %107 = vector.broadcast %106 : vector<16x1xf32> to vector<16x16xf32>
    %108 = arith.mulf %103, %107 : vector<16x16xf32>
    %109 = arith.truncf %108 : vector<16x16xf32> to vector<16x16xbf16>
    %cst_50 = arith.constant dense<0.000000e+00> : vector<16x8xf32>
    %110 = tpu.matmul %109, %95, %cst_50 {dimension_numbers = #tpu.dot_dimension_numbers<[1], [0], [0], [1], [0, 0, 1, 1], [], []>} : vector<16x16xbf16>, vector<16x8xbf16>, vector<16x8xf32> -> vector<16x8xf32>
    %111 = tpu.concatenate %59, %76, %93, %110 in 1 : vector<16x8xf32>, vector<16x8xf32>, vector<16x8xf32>, vector<16x8xf32> -> vector<16x32xf32>
    %112 = arith.truncf %111 : vector<16x32xf32> to vector<16x32xbf16>
    %c0_51 = arith.constant 0 : index
    %c0_52 = arith.constant 0 : index
    %c0_53 = arith.constant 0 : index
    %113 = vector.load %arg7[%c0_51, %c0_52, %c0_53] : memref<1x32x32xbf16, #tpu.memory_space<vmem>>, vector<1x32x32xbf16>
    %114 = vector.shape_cast %113 : vector<1x32x32xbf16> to vector<32x32xbf16>
    %cst_54 = arith.constant dense<0.000000e+00> : vector<16x32xf32>
    %115 = tpu.matmul %112, %114, %cst_54 {dimension_numbers = #tpu.dot_dimension_numbers<[1], [0], [0], [1], [0, 0, 1, 1], [], []>} : vector<16x32xbf16>, vector<32x32xbf16>, vector<16x32xf32> -> vector<16x32xf32>
    %c0_55 = arith.constant 0 : index
    %c0_56 = arith.constant 0 : index
    %c0_57 = arith.constant 0 : index
    %116 = vector.load %arg8[%c0_55, %c0_56, %c0_57] : memref<1x1x32xf32, #tpu.memory_space<vmem>>, vector<1x1x32xf32>
    %117 = vector.shape_cast %116 : vector<1x1x32xf32> to vector<1x32xf32>
    %118 = vector.broadcast %117 : vector<1x32xf32> to vector<16x32xf32>
    %119 = arith.addf %115, %118 : vector<16x32xf32>
    %120 = arith.addf %40, %119 : vector<16x32xf32>
    %c0_58 = arith.constant 0 : index
    %c0_59 = arith.constant 0 : index
    %c0_60 = arith.constant 0 : index
    %121 = vector.load %arg9[%c0_58, %c0_59, %c0_60] : memref<1x1x32xf32, #tpu.memory_space<vmem>>, vector<1x1x32xf32>
    %122 = vector.shape_cast %121 : vector<1x1x32xf32> to vector<1x32xf32>
    %c0_61 = arith.constant 0 : index
    %c0_62 = arith.constant 0 : index
    %c0_63 = arith.constant 0 : index
    %123 = vector.load %arg10[%c0_61, %c0_62, %c0_63] : memref<1x1x32xf32, #tpu.memory_space<vmem>>, vector<1x1x32xf32>
    %124 = vector.shape_cast %123 : vector<1x1x32xf32> to vector<1x32xf32>
    %cst_64 = arith.constant dense<0.000000e+00> : vector<16xf32>
    %125 = vector.multi_reduction <add>, %120, %cst_64 [1] : vector<16x32xf32> to vector<16xf32>
    %126 = vector.shape_cast %125 : vector<16xf32> to vector<16x1xf32>
    %cst_65 = arith.constant 3.200000e+01 : f32
    %127 = vector.broadcast %cst_65 : f32 to vector<16x1xf32>
    %128 = arith.divf %126, %127 : vector<16x1xf32>
    %129 = vector.broadcast %128 : vector<16x1xf32> to vector<16x32xf32>
    %130 = arith.subf %120, %129 : vector<16x32xf32>
    %131 = arith.mulf %130, %130 : vector<16x32xf32>
    %cst_66 = arith.constant dense<0.000000e+00> : vector<16xf32>
    %132 = vector.multi_reduction <add>, %131, %cst_66 [1] : vector<16x32xf32> to vector<16xf32>
    %133 = vector.shape_cast %132 : vector<16xf32> to vector<16x1xf32>
    %cst_67 = arith.constant 3.200000e+01 : f32
    %134 = vector.broadcast %cst_67 : f32 to vector<16x1xf32>
    %135 = arith.divf %133, %134 : vector<16x1xf32>
    %136 = vector.broadcast %128 : vector<16x1xf32> to vector<16x32xf32>
    %137 = arith.subf %120, %136 : vector<16x32xf32>
    %cst_68 = arith.constant 9.99999974E-6 : f32
    %138 = vector.broadcast %cst_68 : f32 to vector<16x1xf32>
    %139 = arith.addf %135, %138 : vector<16x1xf32>
    %140 = math.rsqrt %139 : vector<16x1xf32>
    %141 = vector.broadcast %140 : vector<16x1xf32> to vector<16x32xf32>
    %142 = arith.mulf %137, %141 : vector<16x32xf32>
    %143 = vector.broadcast %122 : vector<1x32xf32> to vector<16x32xf32>
    %144 = arith.mulf %142, %143 : vector<16x32xf32>
    %145 = vector.broadcast %124 : vector<1x32xf32> to vector<16x32xf32>
    %146 = arith.addf %144, %145 : vector<16x32xf32>
    %147 = arith.truncf %146 : vector<16x32xf32> to vector<16x32xbf16>
    %c0_69 = arith.constant 0 : index
    %c0_70 = arith.constant 0 : index
    %c0_71 = arith.constant 0 : index
    %148 = vector.load %arg11[%c0_69, %c0_70, %c0_71] : memref<1x32x32xbf16, #tpu.memory_space<vmem>>, vector<1x32x32xbf16>
    %149 = vector.shape_cast %148 : vector<1x32x32xbf16> to vector<32x32xbf16>
    %cst_72 = arith.constant dense<0.000000e+00> : vector<16x32xf32>
    %150 = tpu.matmul %147, %149, %cst_72 {dimension_numbers = #tpu.dot_dimension_numbers<[1], [0], [0], [1], [0, 0, 1, 1], [], []>} : vector<16x32xbf16>, vector<32x32xbf16>, vector<16x32xf32> -> vector<16x32xf32>
    %c0_73 = arith.constant 0 : index
    %c0_74 = arith.constant 0 : index
    %c0_75 = arith.constant 0 : index
    %151 = vector.load %arg12[%c0_73, %c0_74, %c0_75] : memref<1x1x32xf32, #tpu.memory_space<vmem>>, vector<1x1x32xf32>
    %152 = vector.shape_cast %151 : vector<1x1x32xf32> to vector<1x32xf32>
    %153 = vector.broadcast %152 : vector<1x32xf32> to vector<16x32xf32>
    %154 = arith.addf %150, %153 : vector<16x32xf32>
    %cst_76 = arith.constant 5.000000e-01 : f32
    %155 = vector.broadcast %cst_76 : f32 to vector<16x32xf32>
    %156 = arith.mulf %155, %154 : vector<16x32xf32>
    %cst_77 = arith.constant 4.471500e-02 : f32
    %157 = vector.broadcast %cst_77 : f32 to vector<16x32xf32>
    %158 = arith.mulf %157, %154 : vector<16x32xf32>
    %159 = arith.mulf %158, %154 : vector<16x32xf32>
    %160 = arith.mulf %159, %154 : vector<16x32xf32>
    %161 = arith.addf %154, %160 : vector<16x32xf32>
    %cst_78 = arith.constant 0.797884583 : f32
    %162 = vector.broadcast %cst_78 : f32 to vector<16x32xf32>
    %163 = arith.mulf %162, %161 : vector<16x32xf32>
    %164 = math.tanh %163 : vector<16x32xf32>
    %cst_79 = arith.constant 1.000000e+00 : f32
    %165 = vector.broadcast %cst_79 : f32 to vector<16x32xf32>
    %166 = arith.addf %165, %164 : vector<16x32xf32>
    %167 = arith.mulf %156, %166 : vector<16x32xf32>
    %168 = arith.truncf %167 : vector<16x32xf32> to vector<16x32xbf16>
    %c0_80 = arith.constant 0 : index
    %c0_81 = arith.constant 0 : index
    %c0_82 = arith.constant 0 : index
    %169 = vector.load %arg13[%c0_80, %c0_81, %c0_82] : memref<1x32x32xbf16, #tpu.memory_space<vmem>>, vector<1x32x32xbf16>
    %170 = vector.shape_cast %169 : vector<1x32x32xbf16> to vector<32x32xbf16>
    %cst_83 = arith.constant dense<0.000000e+00> : vector<16x32xf32>
    %171 = tpu.matmul %168, %170, %cst_83 {dimension_numbers = #tpu.dot_dimension_numbers<[1], [0], [0], [1], [0, 0, 1, 1], [], []>} : vector<16x32xbf16>, vector<32x32xbf16>, vector<16x32xf32> -> vector<16x32xf32>
    %c0_84 = arith.constant 0 : index
    %c0_85 = arith.constant 0 : index
    %c0_86 = arith.constant 0 : index
    %172 = vector.load %arg14[%c0_84, %c0_85, %c0_86] : memref<1x1x32xf32, #tpu.memory_space<vmem>>, vector<1x1x32xf32>
    %173 = vector.shape_cast %172 : vector<1x1x32xf32> to vector<1x32xf32>
    %174 = vector.broadcast %173 : vector<1x32xf32> to vector<16x32xf32>
    %175 = arith.addf %171, %174 : vector<16x32xf32>
    %176 = arith.addf %120, %175 : vector<16x32xf32>
    %c0_87 = arith.constant 0 : index
    %c0_88 = arith.constant 0 : index
    %177 = vector.load %arg15[%c0_87, %c0_88] : memref<16x32xf32, #tpu.memory_space<vmem>>, vector<16x32xf32>
    tpu.vector_store %arg15[%c0_87, %c0_88], %176 {strides = array<i32>} : memref<16x32xf32, #tpu.memory_space<vmem>>, vector<16x32xf32>,
    return
  }
  func.func @transform_0(%arg0: i32) -> (i32, i32) {
    %c0_i32 = arith.constant 0 : i32
    %c0_i32_0 = arith.constant 0 : i32
    %c0_i32_1 = arith.constant 0 : i32
    return %c0_i32, %c0_i32_0 : i32, i32
  }
  func.func @transform_1(%arg0: i32) -> (i32, i32) {
    %c0_i32 = arith.constant 0 : i32
    %c0_i32_0 = arith.constant 0 : i32
    %c0_i32_1 = arith.constant 0 : i32
    return %c0_i32, %c0_i32_0 : i32, i32
  }
  func.func @transform_2(%arg0: i32) -> (i32, i32, i32) {
    %c0_i32 = arith.constant 0 : i32
    %c0_i32_0 = arith.constant 0 : i32
    %c0_i32_1 = arith.constant 0 : i32
    return %arg0, %c0_i32, %c0_i32_0 : i32, i32, i32
  }
  func.func @transform_3(%arg0: i32) -> (i32, i32, i32) {
    %c0_i32 = arith.constant 0 : i32
    %c0_i32_0 = arith.constant 0 : i32
    %c0_i32_1 = arith.constant 0 : i32
    return %arg0, %c0_i32, %c0_i32_0 : i32, i32, i32
  }
  func.func @transform_4(%arg0: i32) -> (i32, i32, i32) {
    %c0_i32 = arith.constant 0 : i32
    %c0_i32_0 = arith.constant 0 : i32
    %c0_i32_1 = arith.constant 0 : i32
    return %arg0, %c0_i32, %c0_i32_0 : i32, i32, i32
  }
  func.func @transform_5(%arg0: i32) -> (i32, i32, i32) {
    %c0_i32 = arith.constant 0 : i32
    %c0_i32_0 = arith.constant 0 : i32
    %c0_i32_1 = arith.constant 0 : i32
    return %arg0, %c0_i32, %c0_i32_0 : i32, i32, i32
  }
  func.func @transform_6(%arg0: i32) -> (i32, i32, i32) {
    %c0_i32 = arith.constant 0 : i32
    %c0_i32_0 = arith.constant 0 : i32
    %c0_i32_1 = arith.constant 0 : i32
    return %arg0, %c0_i32, %c0_i32_0 : i32, i32, i32
  }
  func.func @transform_7(%arg0: i32) -> (i32, i32, i32) {
    %c0_i32 = arith.constant 0 : i32
    %c0_i32_0 = arith.constant 0 : i32
    %c0_i32_1 = arith.constant 0 : i32
    return %arg0, %c0_i32, %c0_i32_0 : i32, i32, i32
  }
  func.func @transform_8(%arg0: i32) -> (i32, i32, i32) {
    %c0_i32 = arith.constant 0 : i32
    %c0_i32_0 = arith.constant 0 : i32
    %c0_i32_1 = arith.constant 0 : i32
    return %arg0, %c0_i32, %c0_i32_0 : i32, i32, i32
  }
  func.func @transform_9(%arg0: i32) -> (i32, i32, i32) {
    %c0_i32 = arith.constant 0 : i32
    %c0_i32_0 = arith.constant 0 : i32
    %c0_i32_1 = arith.constant 0 : i32
    return %arg0, %c0_i32, %c0_i32_0 : i32, i32, i32
  }
  func.func @transform_10(%arg0: i32) -> (i32, i32, i32) {
    %c0_i32 = arith.constant 0 : i32
    %c0_i32_0 = arith.constant 0 : i32
    %c0_i32_1 = arith.constant 0 : i32
    return %arg0, %c0_i32, %c0_i32_0 : i32, i32, i32
  }
  func.func @transform_11(%arg0: i32) -> (i32, i32, i32) {
    %c0_i32 = arith.constant 0 : i32
    %c0_i32_0 = arith.constant 0 : i32
    %c0_i32_1 = arith.constant 0 : i32
    return %arg0, %c0_i32, %c0_i32_0 : i32, i32, i32
  }
  func.func @transform_12(%arg0: i32) -> (i32, i32, i32) {
    %c0_i32 = arith.constant 0 : i32
    %c0_i32_0 = arith.constant 0 : i32
    %c0_i32_1 = arith.constant 0 : i32
    return %arg0, %c0_i32, %c0_i32_0 : i32, i32, i32
  }
  func.func @transform_13(%arg0: i32) -> (i32, i32, i32) {
    %c0_i32 = arith.constant 0 : i32
    %c0_i32_0 = arith.constant 0 : i32
    %c0_i32_1 = arith.constant 0 : i32
    return %arg0, %c0_i32, %c0_i32_0 : i32, i32, i32
  }
  func.func @transform_14(%arg0: i32) -> (i32, i32) {
    %c0_i32 = arith.constant 0 : i32
    %c0_i32_0 = arith.constant 0 : i32
    %c0_i32_1 = arith.constant 0 : i32
    return %c0_i32, %c0_i32_0 : i32, i32
  }
}

</mosaic_0001>

<llo_original>
// kernel: tpu_custom_call.1
$region0: #{tpu_custom_call.1}
  #allocation0 [shape = 'u32[]', space=smem, size = 0x4, offset = 0x4, fixed_abs, tag = 'smem constant byte address 0x4 - core index']
  #allocation1 [shape = 'u32[144,128]{1,0:T(1,128)}', space=vmem, size = 0x12000, scoped, tag = 'internal scratch']
  #allocation2 [shape = 'f32[16,16]{1,0:T(8,128)}', space=vmem, size = 0x2000, scoped, tag = 'scratch operand']
  #allocation3 [shape = 'bf16[16,96]{1,0:T(16,128)(2,1)}', space=vmem, size = 0x1000, scoped, tag = 'scratch operand']
  %s0 = inlined_call_operand.hbm [shape: s8[16,16], index: 0, kind: input, shape index: {}]
  %s1 = inlined_call_operand.hbm [shape: f32[16,32], index: 1, kind: input, shape index: {}]
  %s2 = inlined_call_operand.hbm [shape: f32[3,1,32], index: 2, kind: input, shape index: {}]
  %s3 = inlined_call_operand.hbm [shape: f32[3,1,32], index: 3, kind: input, shape index: {}]
  %s4 = inlined_call_operand.hbm [shape: bf16[3,32,96], index: 4, kind: input, shape index: {}]
  %s5 = inlined_call_operand.hbm [shape: f32[3,1,96], index: 5, kind: input, shape index: {}]
  %s6 = inlined_call_operand.hbm [shape: bf16[3,32,32], index: 6, kind: input, shape index: {}]
  %s7 = inlined_call_operand.hbm [shape: f32[3,1,32], index: 7, kind: input, shape index: {}]
  %s8 = inlined_call_operand.hbm [shape: f32[3,1,32], index: 8, kind: input, shape index: {}]
  %s9 = inlined_call_operand.hbm [shape: f32[3,1,32], index: 9, kind: input, shape index: {}]
  %s10 = inlined_call_operand.hbm [shape: bf16[3,32,32], index: 10, kind: input, shape index: {}]
  %s11 = inlined_call_operand.hbm [shape: f32[3,1,32], index: 11, kind: input, shape index: {}]
  %s12 = inlined_call_operand.hbm [shape: bf16[3,32,32], index: 12, kind: input, shape index: {}]
  %s13 = inlined_call_operand.hbm [shape: f32[3,1,32], index: 13, kind: input, shape index: {}]
  %s14 = inlined_call_operand.hbm [shape: f32[16,32], index: 14, kind: output, shape index: {}]
  %s15 = sld [smem:[#allocation0]]
  $region149: #{tpu_custom_call.1} parent=0
    _
  %s17 = ssub.s32 1, %s15
  %s18 = scalar_select 0, %s17, %s15
  $region1: #{tpu_custom_call.1} parent=0
    #allocation4 [shape = 'u8[2048]{0}', space=vmem, size = 0x800, scoped, tag = 'input window, operand 0, single buffered']
    #allocation5 [shape = 's32[2]{0}', space=sflag, size = 0x8, scoped, tag = 'scoped memory for tpu_custom_call.1']
    #allocation6 [shape = 's32[2]{0}', space=sflag, size = 0x8, scoped, tag = 'scoped memory for tpu_custom_call.1']
    #allocation7 [shape = 'u8[8192]{0}', space=vmem, size = 0x2000, scoped, tag = 'input window, operand 1, single buffered']
    #allocation8 [shape = 's32[1]{0}', space=sflag, size = 0x4, scoped, tag = 'scoped memory for tpu_custom_call.1']
    #allocation9 [shape = 'u8[1024]{0}', space=vmem, size = 0x400, scoped, tag = 'input window, operand 2']
    #allocation10 [shape = 'u8[1024]{0}', space=vmem, size = 0x400, scoped, tag = 'input window, operand 3']
    #allocation11 [shape = 'u8[16384]{0}', space=vmem, size = 0x4000, scoped, tag = 'input window, operand 4']
    #allocation12 [shape = 'u8[1024]{0}', space=vmem, size = 0x400, scoped, tag = 'input window, operand 5']
    #allocation13 [shape = 'u8[16384]{0}', space=vmem, size = 0x4000, scoped, tag = 'input window, operand 6']
    #allocation14 [shape = 'u8[1024]{0}', space=vmem, size = 0x400, scoped, tag = 'input window, operand 7']
    #allocation15 [shape = 'u8[1024]{0}', space=vmem, size = 0x400, scoped, tag = 'input window, operand 8']
    #allocation16 [shape = 'u8[1024]{0}', space=vmem, size = 0x400, scoped, tag = 'input window, operand 9']
    #allocation17 [shape = 'u8[16384]{0}', space=vmem, size = 0x4000, scoped, tag = 'input window, operand 10']
    #allocation18 [shape = 'u8[1024]{0}', space=vmem, size = 0x400, scoped, tag = 'input window, operand 11']
    #allocation19 [shape = 'u8[16384]{0}', space=vmem, size = 0x4000, scoped, tag = 'input window, operand 12']
    #allocation20 [shape = 'u8[1024]{0}', space=vmem, size = 0x400, scoped, tag = 'input window, operand 13']
    #allocation21 [shape = 'u8[8192]{0}', space=vmem, size = 0x2000, scoped, tag = 'output window, operand 0, single buffered']
    %19 = vsyncpa [#allocation5], 0
    %20 = vsyncpa [#allocation8], 0
    %21 = vsyncpa [#allocation6], 0
    loop: start=0, step=1, limit=5
    $region2: #{tpu_custom_call.1} parent=1 // loop_pre_header
      _
    $region3: #{tpu_custom_call.1} parent=1 // loop_header
      %s23 = sphi 0, %s27
      %p24 = scmp.ge.s32.totalorder %s23, 5
      %s31 = sphi 0, %s31
      %s33 = sphi 0, %s31
      %s34 = sphi 0, %s33
      %s48 = sphi 0, %s34
      %s52 = sphi 0, %s52
      %s54 = sphi 0, %s52
      %s55 = sphi 0, %s54
      %s69 = sphi 0, %s55
      %s75 = sphi 0, %s77
      %s78 = sphi 0, %s75
      %s79 = sphi 0, %s78
      %s95 = sphi 0, %s79
      %s101 = sphi 0, %s103
      %s104 = sphi 0, %s101
      %s105 = sphi 0, %s104
      %s121 = sphi 0, %s105
      %s127 = sphi 0, %s129
      %s130 = sphi 0, %s127
      %s131 = sphi 0, %s130
      %s147 = sphi 0, %s131
      %s153 = sphi 0, %s155
      %s156 = sphi 0, %s153
      %s157 = sphi 0, %s156
      %s173 = sphi 0, %s157
      %s179 = sphi 0, %s181
      %s182 = sphi 0, %s179
      %s183 = sphi 0, %s182
      %s199 = sphi 0, %s183
      %s205 = sphi 0, %s207
      %s208 = sphi 0, %s205
      %s209 = sphi 0, %s208
      %s225 = sphi 0, %s209
      %s231 = sphi 0, %s233
      %s234 = sphi 0, %s231
      %s235 = sphi 0, %s234
      %s251 = sphi 0, %s235
      %s257 = sphi 0, %s259
      %s260 = sphi 0, %s257
      %s261 = sphi 0, %s260
      %s277 = sphi 0, %s261
      %s283 = sphi 0, %s285
      %s286 = sphi 0, %s283
      %s287 = sphi 0, %s286
      %s303 = sphi 0, %s287
      %s309 = sphi 0, %s311
      %s312 = sphi 0, %s309
      %s313 = sphi 0, %s312
      %s329 = sphi 0, %s313
      %s335 = sphi 0, %s337
      %s338 = sphi 0, %s335
      %s339 = sphi 0, %s338
      %s355 = sphi 0, %s339
      %s361 = sphi 0, %s363
      %s364 = sphi 0, %s361
      %s365 = sphi 0, %s364
      %s381 = sphi 0, %s365
      %s385 = sphi 0, %s385
      %s387 = sphi 0, %s385
      %s388 = sphi 0, %s387
      %s402 = sphi 0, %s388
    $region4: #{tpu_custom_call.1} parent=1 // loop_header_branch
      %26 = sbr.rel (%p24) target = $region8
    $region5: #{tpu_custom_call.1} parent=1 // loop_body
      %s28 = ssub.s32 %s23, 1
      %s29 = ssub.s32 %s23, 2
      %s30 = sadd.s32 %s23, 1
      %s32 = sadd.s32 %s31, 1
      %p35 = scmp.eq.s32.totalorder %s23, 2
      %p36 = scmp.ne.s32.totalorder %s31, %s33
      %p37 = scmp.eq.s32.totalorder %s23, 0
      %p38 = por %p36, %p37
      %p39 = scmp.ne.s32.totalorder %s31, %s33
      %p40 = scmp.eq.s32.totalorder %s28, 2
      %p41 = por %p39, %p40
      %p42 = scmp.ne.s32.totalorder %s33, %s34
      %p43 = scmp.eq.s32.totalorder %s28, 0
      %p44 = por %p42, %p43
      %p45 = scmp.ne.s32.totalorder %s33, %s34
      %p46 = scmp.eq.s32.totalorder %s29, 2
      %p47 = por %p45, %p46
      %p49 = scmp.ne.s32.totalorder %s34, %s48
      %p50 = scmp.eq.s32.totalorder %s29, 0
      %p51 = por %p49, %p50
      %s53 = sadd.s32 %s52, 1
      %p56 = scmp.eq.s32.totalorder %s23, 2
      %p57 = scmp.ne.s32.totalorder %s52, %s54
      %p58 = scmp.eq.s32.totalorder %s23, 0
      %p59 = por %p57, %p58
      %p60 = scmp.ne.s32.totalorder %s52, %s54
      %p61 = scmp.eq.s32.totalorder %s28, 2
      %p62 = por %p60, %p61
      %p63 = scmp.ne.s32.totalorder %s54, %s55
      %p64 = scmp.eq.s32.totalorder %s28, 0
      %p65 = por %p63, %p64
      %p66 = scmp.ne.s32.totalorder %s54, %s55
      %p67 = scmp.eq.s32.totalorder %s29, 2
      %p68 = por %p66, %p67
      %p70 = scmp.ne.s32.totalorder %s55, %s69
      %p71 = scmp.eq.s32.totalorder %s29, 0
      %p72 = por %p70, %p71
      %s73 = ssub.s32 %s23, %s30
      %p74 = scmp.eq.s32.totalorder %s73, 0
      %s76 = sadd.s32 %s75, 1
      %s77 = scalar_select %p74, %s75, %s76
      %p80 = pneg %p74
      %p81 = scmp.eq.s32.totalorder %s23, 2
      %p82 = por %p80, %p81
      %p83 = scmp.ne.s32.totalorder %s75, %s78
      %p84 = scmp.eq.s32.totalorder %s23, 0
      %p85 = por %p83, %p84
      %p86 = scmp.ne.s32.totalorder %s75, %s78
      %p87 = scmp.eq.s32.totalorder %s28, 2
      %p88 = por %p86, %p87
      %p89 = scmp.ne.s32.totalorder %s78, %s79
      %p90 = scmp.eq.s32.totalorder %s28, 0
      %p91 = por %p89, %p90
      %p92 = scmp.ne.s32.totalorder %s78, %s79
      %p93 = scmp.eq.s32.totalorder %s29, 2
      %p94 = por %p92, %p93
      %p96 = scmp.ne.s32.totalorder %s79, %s95
      %p97 = scmp.eq.s32.totalorder %s29, 0
      %p98 = por %p96, %p97
      %s99 = ssub.s32 %s23, %s30
      %p100 = scmp.eq.s32.totalorder %s99, 0
      %s102 = sadd.s32 %s101, 1
      %s103 = scalar_select %p100, %s101, %s102
      %p106 = pneg %p100
      %p107 = scmp.eq.s32.totalorder %s23, 2
      %p108 = por %p106, %p107
      %p109 = scmp.ne.s32.totalorder %s101, %s104
      %p110 = scmp.eq.s32.totalorder %s23, 0
      %p111 = por %p109, %p110
      %p112 = scmp.ne.s32.totalorder %s101, %s104
      %p113 = scmp.eq.s32.totalorder %s28, 2
      %p114 = por %p112, %p113
      %p115 = scmp.ne.s32.totalorder %s104, %s105
      %p116 = scmp.eq.s32.totalorder %s28, 0
      %p117 = por %p115, %p116
      %p118 = scmp.ne.s32.totalorder %s104, %s105
      %p119 = scmp.eq.s32.totalorder %s29, 2
      %p120 = por %p118, %p119
      %p122 = scmp.ne.s32.totalorder %s105, %s121
      %p123 = scmp.eq.s32.totalorder %s29, 0
      %p124 = por %p122, %p123
      %s125 = ssub.s32 %s23, %s30
      %p126 = scmp.eq.s32.totalorder %s125, 0
      %s128 = sadd.s32 %s127, 1
      %s129 = scalar_select %p126, %s127, %s128
      %p132 = pneg %p126
      %p133 = scmp.eq.s32.totalorder %s23, 2
      %p134 = por %p132, %p133
      %p135 = scmp.ne.s32.totalorder %s127, %s130
      %p136 = scmp.eq.s32.totalorder %s23, 0
      %p137 = por %p135, %p136
      %p138 = scmp.ne.s32.totalorder %s127, %s130
      %p139 = scmp.eq.s32.totalorder %s28, 2
      %p140 = por %p138, %p139
      %p141 = scmp.ne.s32.totalorder %s130, %s131
      %p142 = scmp.eq.s32.totalorder %s28, 0
      %p143 = por %p141, %p142
      %p144 = scmp.ne.s32.totalorder %s130, %s131
      %p145 = scmp.eq.s32.totalorder %s29, 2
      %p146 = por %p144, %p145
      %p148 = scmp.ne.s32.totalorder %s131, %s147
      %p149 = scmp.eq.s32.totalorder %s29, 0
      %p150 = por %p148, %p149
      %s151 = ssub.s32 %s23, %s30
      %p152 = scmp.eq.s32.totalorder %s151, 0
      %s154 = sadd.s32 %s153, 1
      %s155 = scalar_select %p152, %s153, %s154
      %p158 = pneg %p152
      %p159 = scmp.eq.s32.totalorder %s23, 2
      %p160 = por %p158, %p159
      %p161 = scmp.ne.s32.totalorder %s153, %s156
      %p162 = scmp.eq.s32.totalorder %s23, 0
      %p163 = por %p161, %p162
      %p164 = scmp.ne.s32.totalorder %s153, %s156
      %p165 = scmp.eq.s32.totalorder %s28, 2
      %p166 = por %p164, %p165
      %p167 = scmp.ne.s32.totalorder %s156, %s157
      %p168 = scmp.eq.s32.totalorder %s28, 0
      %p169 = por %p167, %p168
      %p170 = scmp.ne.s32.totalorder %s156, %s157
      %p171 = scmp.eq.s32.totalorder %s29, 2
      %p172 = por %p170, %p171
      %p174 = scmp.ne.s32.totalorder %s157, %s173
      %p175 = scmp.eq.s32.totalorder %s29, 0
      %p176 = por %p174, %p175
      %s177 = ssub.s32 %s23, %s30
      %p178 = scmp.eq.s32.totalorder %s177, 0
      %s180 = sadd.s32 %s179, 1
      %s181 = scalar_select %p178, %s179, %s180
      %p184 = pneg %p178
      %p185 = scmp.eq.s32.totalorder %s23, 2
      %p186 = por %p184, %p185
      %p187 = scmp.ne.s32.totalorder %s179, %s182
      %p188 = scmp.eq.s32.totalorder %s23, 0
      %p189 = por %p187, %p188
      %p190 = scmp.ne.s32.totalorder %s179, %s182
      %p191 = scmp.eq.s32.totalorder %s28, 2
      %p192 = por %p190, %p191
      %p193 = scmp.ne.s32.totalorder %s182, %s183
      %p194 = scmp.eq.s32.totalorder %s28, 0
      %p195 = por %p193, %p194
      %p196 = scmp.ne.s32.totalorder %s182, %s183
      %p197 = scmp.eq.s32.totalorder %s29, 2
      %p198 = por %p196, %p197
      %p200 = scmp.ne.s32.totalorder %s183, %s199
      %p201 = scmp.eq.s32.totalorder %s29, 0
      %p202 = por %p200, %p201
      %s203 = ssub.s32 %s23, %s30
      %p204 = scmp.eq.s32.totalorder %s203, 0
      %s206 = sadd.s32 %s205, 1
      %s207 = scalar_select %p204, %s205, %s206
      %p210 = pneg %p204
      %p211 = scmp.eq.s32.totalorder %s23, 2
      %p212 = por %p210, %p211
      %p213 = scmp.ne.s32.totalorder %s205, %s208
      %p214 = scmp.eq.s32.totalorder %s23, 0
      %p215 = por %p213, %p214
      %p216 = scmp.ne.s32.totalorder %s205, %s208
      %p217 = scmp.eq.s32.totalorder %s28, 2
      %p218 = por %p216, %p217
      %p219 = scmp.ne.s32.totalorder %s208, %s209
      %p220 = scmp.eq.s32.totalorder %s28, 0
      %p221 = por %p219, %p220
      %p222 = scmp.ne.s32.totalorder %s208, %s209
      %p223 = scmp.eq.s32.totalorder %s29, 2
      %p224 = por %p222, %p223
      %p226 = scmp.ne.s32.totalorder %s209, %s225
      %p227 = scmp.eq.s32.totalorder %s29, 0
      %p228 = por %p226, %p227
      %s229 = ssub.s32 %s23, %s30
      %p230 = scmp.eq.s32.totalorder %s229, 0
      %s232 = sadd.s32 %s231, 1
      %s233 = scalar_select %p230, %s231, %s232
      %p236 = pneg %p230
      %p237 = scmp.eq.s32.totalorder %s23, 2
      %p238 = por %p236, %p237
      %p239 = scmp.ne.s32.totalorder %s231, %s234
      %p240 = scmp.eq.s32.totalorder %s23, 0
      %p241 = por %p239, %p240
      %p242 = scmp.ne.s32.totalorder %s231, %s234
      %p243 = scmp.eq.s32.totalorder %s28, 2
      %p244 = por %p242, %p243
      %p245 = scmp.ne.s32.totalorder %s234, %s235
      %p246 = scmp.eq.s32.totalorder %s28, 0
      %p247 = por %p245, %p246
      %p248 = scmp.ne.s32.totalorder %s234, %s235
      %p249 = scmp.eq.s32.totalorder %s29, 2
      %p250 = por %p248, %p249
      %p252 = scmp.ne.s32.totalorder %s235, %s251
      %p253 = scmp.eq.s32.totalorder %s29, 0
      %p254 = por %p252, %p253
      %s255 = ssub.s32 %s23, %s30
      %p256 = scmp.eq.s32.totalorder %s255, 0
      %s258 = sadd.s32 %s257, 1
      %s259 = scalar_select %p256, %s257, %s258
      %p262 = pneg %p256
      %p263 = scmp.eq.s32.totalorder %s23, 2
      %p264 = por %p262, %p263
      %p265 = scmp.ne.s32.totalorder %s257, %s260
      %p266 = scmp.eq.s32.totalorder %s23, 0
      %p267 = por %p265, %p266
      %p268 = scmp.ne.s32.totalorder %s257, %s260
      %p269 = scmp.eq.s32.totalorder %s28, 2
      %p270 = por %p268, %p269
      %p271 = scmp.ne.s32.totalorder %s260, %s261
      %p272 = scmp.eq.s32.totalorder %s28, 0
      %p273 = por %p271, %p272
      %p274 = scmp.ne.s32.totalorder %s260, %s261
      %p275 = scmp.eq.s32.totalorder %s29, 2
      %p276 = por %p274, %p275
      %p278 = scmp.ne.s32.totalorder %s261, %s277
      %p279 = scmp.eq.s32.totalorder %s29, 0
      %p280 = por %p278, %p279
      %s281 = ssub.s32 %s23, %s30
      %p282 = scmp.eq.s32.totalorder %s281, 0
      %s284 = sadd.s32 %s283, 1
      %s285 = scalar_select %p282, %s283, %s284
      %p288 = pneg %p282
      %p289 = scmp.eq.s32.totalorder %s23, 2
      %p290 = por %p288, %p289
      %p291 = scmp.ne.s32.totalorder %s283, %s286
      %p292 = scmp.eq.s32.totalorder %s23, 0
      %p293 = por %p291, %p292
      %p294 = scmp.ne.s32.totalorder %s283, %s286
      %p295 = scmp.eq.s32.totalorder %s28, 2
      %p296 = por %p294, %p295
      %p297 = scmp.ne.s32.totalorder %s286, %s287
      %p298 = scmp.eq.s32.totalorder %s28, 0
      %p299 = por %p297, %p298
      %p300 = scmp.ne.s32.totalorder %s286, %s287
      %p301 = scmp.eq.s32.totalorder %s29, 2
      %p302 = por %p300, %p301
      %p304 = scmp.ne.s32.totalorder %s287, %s303
      %p305 = scmp.eq.s32.totalorder %s29, 0
      %p306 = por %p304, %p305
      %s307 = ssub.s32 %s23, %s30
      %p308 = scmp.eq.s32.totalorder %s307, 0
      %s310 = sadd.s32 %s309, 1
      %s311 = scalar_select %p308, %s309, %s310
      %p314 = pneg %p308
      %p315 = scmp.eq.s32.totalorder %s23, 2
      %p316 = por %p314, %p315
      %p317 = scmp.ne.s32.totalorder %s309, %s312
      %p318 = scmp.eq.s32.totalorder %s23, 0
      %p319 = por %p317, %p318
      %p320 = scmp.ne.s32.totalorder %s309, %s312
      %p321 = scmp.eq.s32.totalorder %s28, 2
      %p322 = por %p320, %p321
      %p323 = scmp.ne.s32.totalorder %s312, %s313
      %p324 = scmp.eq.s32.totalorder %s28, 0
      %p325 = por %p323, %p324
      %p326 = scmp.ne.s32.totalorder %s312, %s313
      %p327 = scmp.eq.s32.totalorder %s29, 2
      %p328 = por %p326, %p327
      %p330 = scmp.ne.s32.totalorder %s313, %s329
      %p331 = scmp.eq.s32.totalorder %s29, 0
      %p332 = por %p330, %p331
      %s333 = ssub.s32 %s23, %s30
      %p334 = scmp.eq.s32.totalorder %s333, 0
      %s336 = sadd.s32 %s335, 1
      %s337 = scalar_select %p334, %s335, %s336
      %p340 = pneg %p334
      %p341 = scmp.eq.s32.totalorder %s23, 2
      %p342 = por %p340, %p341
      %p343 = scmp.ne.s32.totalorder %s335, %s338
      %p344 = scmp.eq.s32.totalorder %s23, 0
      %p345 = por %p343, %p344
      %p346 = scmp.ne.s32.totalorder %s335, %s338
      %p347 = scmp.eq.s32.totalorder %s28, 2
      %p348 = por %p346, %p347
      %p349 = scmp.ne.s32.totalorder %s338, %s339
      %p350 = scmp.eq.s32.totalorder %s28, 0
      %p351 = por %p349, %p350
      %p352 = scmp.ne.s32.totalorder %s338, %s339
      %p353 = scmp.eq.s32.totalorder %s29, 2
      %p354 = por %p352, %p353
      %p356 = scmp.ne.s32.totalorder %s339, %s355
      %p357 = scmp.eq.s32.totalorder %s29, 0
      %p358 = por %p356, %p357
      %s359 = ssub.s32 %s23, %s30
      %p360 = scmp.eq.s32.totalorder %s359, 0
      %s362 = sadd.s32 %s361, 1
      %s363 = scalar_select %p360, %s361, %s362
      %p366 = pneg %p360
      %p367 = scmp.eq.s32.totalorder %s23, 2
      %p368 = por %p366, %p367
      %p369 = scmp.ne.s32.totalorder %s361, %s364
      %p370 = scmp.eq.s32.totalorder %s23, 0
      %p371 = por %p369, %p370
      %p372 = scmp.ne.s32.totalorder %s361, %s364
      %p373 = scmp.eq.s32.totalorder %s28, 2
      %p374 = por %p372, %p373
      %p375 = scmp.ne.s32.totalorder %s364, %s365
      %p376 = scmp.eq.s32.totalorder %s28, 0
      %p377 = por %p375, %p376
      %p378 = scmp.ne.s32.totalorder %s364, %s365
      %p379 = scmp.eq.s32.totalorder %s29, 2
      %p380 = por %p378, %p379
      %p382 = scmp.ne.s32.totalorder %s365, %s381
      %p383 = scmp.eq.s32.totalorder %s29, 0
      %p384 = por %p382, %p383
      %s386 = sadd.s32 %s385, 1
      %p389 = scmp.eq.s32.totalorder %s23, 2
      %p390 = scmp.ne.s32.totalorder %s385, %s387
      %p391 = scmp.eq.s32.totalorder %s23, 0
      %p392 = por %p390, %p391
      %p393 = scmp.ne.s32.totalorder %s385, %s387
      %p394 = scmp.eq.s32.totalorder %s28, 2
      %p395 = por %p393, %p394
      %p396 = scmp.ne.s32.totalorder %s387, %s388
      %p397 = scmp.eq.s32.totalorder %s28, 0
      %p398 = por %p396, %p397
      %p399 = scmp.ne.s32.totalorder %s387, %s388
      %p400 = scmp.eq.s32.totalorder %s29, 2
      %p401 = por %p399, %p400
      %p403 = scmp.ne.s32.totalorder %s388, %s402
      %p404 = scmp.eq.s32.totalorder %s29, 0
      %p405 = por %p403, %p404
      %p406 = scmp.le.s32.totalorder 1, %s23
      %p407 = scmp.lt.s32.totalorder %s23, 4
      %p408 = pnand %p406, %p407
      %p409 = pneg %p408
      // Predicated region
      $region9: #{tpu_custom_call.1} parent=5 // pred_check
        _
      $region10: #{tpu_custom_call.1} parent=5 // pred_check_branch
        %411 = sbr.rel (%p408) target = $region12
      $region11: #{tpu_custom_call.1} parent=5 // pred_region
        %s412 = ssub.s32 %s23, 1
        // Predicated region
        $region13: #{tpu_custom_call.1} parent=11 // pred_check
          %p413 = pneg %p44
        $region14: #{tpu_custom_call.1} parent=11 // pred_check_branch
          %415 = sbr.rel (%p413) target = $region16
        $region15: #{tpu_custom_call.1} parent=11 // pred_region
          %s417 = ssub.s32 64, 64
          %418 = vsyncadd [#allocation5], %s417
          %s419 = sshll.u32 [#allocation4], 4
          %s420 = int_to_ptr.vmem [resolvable:$true] %s419
          %425 = dma.hbm_to_vmem [thread:$0]  %s0, 64, %s420, [#allocation5], 32, 32, 2
        $region16: #{tpu_custom_call.1} parent=11 // pred_fallthru
          _
        // Predicated region
        $region17: #{tpu_custom_call.1} parent=11 // pred_check
          %p426 = pneg %p65
        $region18: #{tpu_custom_call.1} parent=11 // pred_check_branch
          %428 = sbr.rel (%p426) target = $region20
        $region19: #{tpu_custom_call.1} parent=11 // pred_region
          %s430 = ssub.s32 256, 256
          %431 = vsyncadd [#allocation8], %s430
          %s432 = sshll.u32 [#allocation7], 4
          %s433 = int_to_ptr.vmem [resolvable:$true] %s432
          %438 = dma.hbm_to_vmem [thread:$0]  %s1, 256, %s433, [#allocation8], 128, 128, 8
        $region20: #{tpu_custom_call.1} parent=11 // pred_fallthru
          _
      $region12: #{tpu_custom_call.1} parent=5 // pred_fallthru
        _
      %p439 = scmp.lt.s32.totalorder %s23, 3
      // Predicated region
      $region21: #{tpu_custom_call.1} parent=5 // pred_check
        %p440 = pneg %p439
      $region22: #{tpu_custom_call.1} parent=5 // pred_check_branch
        %442 = sbr.rel (%p440) target = $region24
      $region23: #{tpu_custom_call.1} parent=5 // pred_region
        // Predicated region
        $region25: #{tpu_custom_call.1} parent=23 // pred_check
          %p443 = pneg %p85
        $region26: #{tpu_custom_call.1} parent=23 // pred_check_branch
          %445 = sbr.rel (%p443) target = $region28
        $region27: #{tpu_custom_call.1} parent=23 // pred_region
          %s446 = sand.u32 %s23, 1
          %s447 = scalar_lea.sflag [#allocation5], %s446
          %s448 = sand.u32 %s75, 1
          %s449 = scalar_lea.vmem [#allocation9], %s448
          %s451 = ssub.s32 16, 16
          %452 = vsyncadd %s447, %s451
          %s453 = smul.addr %s23, 16
          %s454 = scalar_lea.hbm %s2, %s453
          %s456 = sshll.u32 %s449, 4
          %s457 = int_to_ptr.vmem [resolvable:$true] %s456
          %459 = dma.hbm_to_vmem [thread:$0]  %s454, 16, %s457, %s447
        $region28: #{tpu_custom_call.1} parent=23 // pred_fallthru
          _
        // Predicated region
        $region29: #{tpu_custom_call.1} parent=23 // pred_check
          %p460 = pneg %p111
        $region30: #{tpu_custom_call.1} parent=23 // pred_check_branch
          %462 = sbr.rel (%p460) target = $region32
        $region31: #{tpu_custom_call.1} parent=23 // pred_region
          %s463 = sand.u32 %s23, 1
          %s464 = scalar_lea.sflag [#allocation5], %s463
          %s465 = sand.u32 %s101, 1
          %s466 = scalar_lea.vmem [#allocation10], %s465
          %s468 = ssub.s32 16, 16
          %469 = vsyncadd %s464, %s468
          %s470 = smul.addr %s23, 16
          %s471 = scalar_lea.hbm %s3, %s470
          %s473 = sshll.u32 %s466, 4
          %s474 = int_to_ptr.vmem [resolvable:$true] %s473
          %476 = dma.hbm_to_vmem [thread:$0]  %s471, 16, %s474, %s464
        $region32: #{tpu_custom_call.1} parent=23 // pred_fallthru
          _
        // Predicated region
        $region33: #{tpu_custom_call.1} parent=23 // pred_check
          %p477 = pneg %p137
        $region34: #{tpu_custom_call.1} parent=23 // pred_check_branch
          %479 = sbr.rel (%p477) target = $region36
        $region35: #{tpu_custom_call.1} parent=23 // pred_region
          %s480 = sand.u32 %s23, 1
          %s481 = scalar_lea.sflag [#allocation5], %s480
          %s482 = sand.u32 %s127, 1
          %s483 = smul.addr %s482, 16
          %s484 = scalar_lea.vmem [#allocation11], %s483
          %s486 = ssub.s32 256, 256
          %487 = vsyncadd %s481, %s486
          %s488 = smul.addr %s23, 4
          %s489 = smul.addr %s488, 64
          %s490 = scalar_lea.hbm %s4, %s489
          %s491 = sshll.u32 %s484, 4
          %s492 = int_to_ptr.vmem [resolvable:$true] %s491
          %497 = dma.hbm_to_vmem [thread:$0]  %s490, 256, %s492, %s481, 64, 64, 4
        $region36: #{tpu_custom_call.1} parent=23 // pred_fallthru
          _
        // Predicated region
        $region37: #{tpu_custom_call.1} parent=23 // pred_check
          %p498 = pneg %p163
        $region38: #{tpu_custom_call.1} parent=23 // pred_check_branch
          %500 = sbr.rel (%p498) target = $region40
        $region39: #{tpu_custom_call.1} parent=23 // pred_region
          %s501 = sand.u32 %s23, 1
          %s502 = scalar_lea.sflag [#allocation5], %s501
          %s503 = sand.u32 %s153, 1
          %s504 = scalar_lea.vmem [#allocation12], %s503
          %s506 = ssub.s32 16, 16
          %507 = vsyncadd %s502, %s506
          %s508 = smul.addr %s23, 16
          %s509 = scalar_lea.hbm %s5, %s508
          %s511 = sshll.u32 %s504, 4
          %s512 = int_to_ptr.vmem [resolvable:$true] %s511
          %514 = dma.hbm_to_vmem [thread:$0]  %s509, 16, %s512, %s502
        $region40: #{tpu_custom_call.1} parent=23 // pred_fallthru
          _
        // Predicated region
        $region41: #{tpu_custom_call.1} parent=23 // pred_check
          %p515 = pneg %p189
        $region42: #{tpu_custom_call.1} parent=23 // pred_check_branch
          %517 = sbr.rel (%p515) target = $region44
        $region43: #{tpu_custom_call.1} parent=23 // pred_region
          %s518 = sand.u32 %s23, 1
          %s519 = scalar_lea.sflag [#allocation5], %s518
          %s520 = sand.u32 %s179, 1
          %s521 = smul.addr %s520, 16
          %s522 = scalar_lea.vmem [#allocation13], %s521
          %s524 = ssub.s32 256, 256
          %525 = vsyncadd %s519, %s524
          %s526 = smul.addr %s23, 4
          %s527 = smul.addr %s526, 64
          %s528 = scalar_lea.hbm %s6, %s527
          %s529 = sshll.u32 %s522, 4
          %s530 = int_to_ptr.vmem [resolvable:$true] %s529
          %535 = dma.hbm_to_vmem [thread:$0]  %s528, 256, %s530, %s519, 64, 64, 4
        $region44: #{tpu_custom_call.1} parent=23 // pred_fallthru
          _
        // Predicated region
        $region45: #{tpu_custom_call.1} parent=23 // pred_check
          %p536 = pneg %p215
        $region46: #{tpu_custom_call.1} parent=23 // pred_check_branch
          %538 = sbr.rel (%p536) target = $region48
        $region47: #{tpu_custom_call.1} parent=23 // pred_region
          %s539 = sand.u32 %s23, 1
          %s540 = scalar_lea.sflag [#allocation5], %s539
          %s541 = sand.u32 %s205, 1
          %s542 = scalar_lea.vmem [#allocation14], %s541
          %s544 = ssub.s32 16, 16
          %545 = vsyncadd %s540, %s544
          %s546 = smul.addr %s23, 16
          %s547 = scalar_lea.hbm %s7, %s546
          %s549 = sshll.u32 %s542, 4
          %s550 = int_to_ptr.vmem [resolvable:$true] %s549
          %552 = dma.hbm_to_vmem [thread:$0]  %s547, 16, %s550, %s540
        $region48: #{tpu_custom_call.1} parent=23 // pred_fallthru
          _
        // Predicated region
        $region49: #{tpu_custom_call.1} parent=23 // pred_check
          %p553 = pneg %p241
        $region50: #{tpu_custom_call.1} parent=23 // pred_check_branch
          %555 = sbr.rel (%p553) target = $region52
        $region51: #{tpu_custom_call.1} parent=23 // pred_region
          %s556 = sand.u32 %s23, 1
          %s557 = scalar_lea.sflag [#allocation5], %s556
          %s558 = sand.u32 %s231, 1
          %s559 = scalar_lea.vmem [#allocation15], %s558
          %s561 = ssub.s32 16, 16
          %562 = vsyncadd %s557, %s561
          %s563 = smul.addr %s23, 16
          %s564 = scalar_lea.hbm %s8, %s563
          %s566 = sshll.u32 %s559, 4
          %s567 = int_to_ptr.vmem [resolvable:$true] %s566
          %569 = dma.hbm_to_vmem [thread:$0]  %s564, 16, %s567, %s557
        $region52: #{tpu_custom_call.1} parent=23 // pred_fallthru
          _
        // Predicated region
        $region53: #{tpu_custom_call.1} parent=23 // pred_check
          %p570 = pneg %p267
        $region54: #{tpu_custom_call.1} parent=23 // pred_check_branch
          %572 = sbr.rel (%p570) target = $region56
        $region55: #{tpu_custom_call.1} parent=23 // pred_region
          %s573 = sand.u32 %s23, 1
          %s574 = scalar_lea.sflag [#allocation5], %s573
          %s575 = sand.u32 %s257, 1
          %s576 = scalar_lea.vmem [#allocation16], %s575
          %s578 = ssub.s32 16, 16
          %579 = vsyncadd %s574, %s578
          %s580 = smul.addr %s23, 16
          %s581 = scalar_lea.hbm %s9, %s580
          %s583 = sshll.u32 %s576, 4
          %s584 = int_to_ptr.vmem [resolvable:$true] %s583
          %586 = dma.hbm_to_vmem [thread:$0]  %s581, 16, %s584, %s574
        $region56: #{tpu_custom_call.1} parent=23 // pred_fallthru
          _
        // Predicated region
        $region57: #{tpu_custom_call.1} parent=23 // pred_check
          %p587 = pneg %p293
        $region58: #{tpu_custom_call.1} parent=23 // pred_check_branch
          %589 = sbr.rel (%p587) target = $region60
        $region59: #{tpu_custom_call.1} parent=23 // pred_region
          %s590 = sand.u32 %s23, 1
          %s591 = scalar_lea.sflag [#allocation5], %s590
          %s592 = sand.u32 %s283, 1
          %s593 = smul.addr %s592, 16
          %s594 = scalar_lea.vmem [#allocation17], %s593
          %s596 = ssub.s32 256, 256
          %597 = vsyncadd %s591, %s596
          %s598 = smul.addr %s23, 4
          %s599 = smul.addr %s598, 64
          %s600 = scalar_lea.hbm %s10, %s599
          %s601 = sshll.u32 %s594, 4
          %s602 = int_to_ptr.vmem [resolvable:$true] %s601
          %607 = dma.hbm_to_vmem [thread:$0]  %s600, 256, %s602, %s591, 64, 64, 4
        $region60: #{tpu_custom_call.1} parent=23 // pred_fallthru
          _
        // Predicated region
        $region61: #{tpu_custom_call.1} parent=23 // pred_check
          %p608 = pneg %p319
        $region62: #{tpu_custom_call.1} parent=23 // pred_check_branch
          %610 = sbr.rel (%p608) target = $region64
        $region63: #{tpu_custom_call.1} parent=23 // pred_region
          %s611 = sand.u32 %s23, 1
          %s612 = scalar_lea.sflag [#allocation5], %s611
          %s613 = sand.u32 %s309, 1
          %s614 = scalar_lea.vmem [#allocation18], %s613
          %s616 = ssub.s32 16, 16
          %617 = vsyncadd %s612, %s616
          %s618 = smul.addr %s23, 16
          %s619 = scalar_lea.hbm %s11, %s618
          %s621 = sshll.u32 %s614, 4
          %s622 = int_to_ptr.vmem [resolvable:$true] %s621
          %624 = dma.hbm_to_vmem [thread:$0]  %s619, 16, %s622, %s612
        $region64: #{tpu_custom_call.1} parent=23 // pred_fallthru
          _
        // Predicated region
        $region65: #{tpu_custom_call.1} parent=23 // pred_check
          %p625 = pneg %p345
        $region66: #{tpu_custom_call.1} parent=23 // pred_check_branch
          %627 = sbr.rel (%p625) target = $region68
        $region67: #{tpu_custom_call.1} parent=23 // pred_region
          %s628 = sand.u32 %s23, 1
          %s629 = scalar_lea.sflag [#allocation5], %s628
          %s630 = sand.u32 %s335, 1
          %s631 = smul.addr %s630, 16
          %s632 = scalar_lea.vmem [#allocation19], %s631
          %s634 = ssub.s32 256, 256
          %635 = vsyncadd %s629, %s634
          %s636 = smul.addr %s23, 4
          %s637 = smul.addr %s636, 64
          %s638 = scalar_lea.hbm %s12, %s637
          %s639 = sshll.u32 %s632, 4
          %s640 = int_to_ptr.vmem [resolvable:$true] %s639
          %645 = dma.hbm_to_vmem [thread:$0]  %s638, 256, %s640, %s629, 64, 64, 4
        $region68: #{tpu_custom_call.1} parent=23 // pred_fallthru
          _
        // Predicated region
        $region69: #{tpu_custom_call.1} parent=23 // pred_check
          %p646 = pneg %p371
        $region70: #{tpu_custom_call.1} parent=23 // pred_check_branch
          %648 = sbr.rel (%p646) target = $region72
        $region71: #{tpu_custom_call.1} parent=23 // pred_region
          %s649 = sand.u32 %s23, 1
          %s650 = scalar_lea.sflag [#allocation5], %s649
          %s651 = sand.u32 %s361, 1
          %s652 = scalar_lea.vmem [#allocation20], %s651
          %s654 = ssub.s32 16, 16
          %655 = vsyncadd %s650, %s654
          %s656 = smul.addr %s23, 16
          %s657 = scalar_lea.hbm %s13, %s656
          %s659 = sshll.u32 %s652, 4
          %s660 = int_to_ptr.vmem [resolvable:$true] %s659
          %662 = dma.hbm_to_vmem [thread:$0]  %s657, 16, %s660, %s650
        $region72: #{tpu_custom_call.1} parent=23 // pred_fallthru
          _
      $region24: #{tpu_custom_call.1} parent=5 // pred_fallthru
        _
      %p663 = scmp.le.s32.totalorder 1, %s23
      %p664 = scmp.lt.s32.totalorder %s23, 4
      %p665 = pnand %p663, %p664
      %p666 = pneg %p665
      // Predicated region
      $region73: #{tpu_custom_call.1} parent=5 // pred_check
        _
      $region74: #{tpu_custom_call.1} parent=5 // pred_check_branch
        %668 = sbr.rel (%p665) target = $region76
      $region75: #{tpu_custom_call.1} parent=5 // pred_region
        %s669 = ssub.s32 %s23, 1
        // Predicated region
        $region77: #{tpu_custom_call.1} parent=75 // pred_check
          %p670 = pneg %p44
        $region78: #{tpu_custom_call.1} parent=75 // pred_check_branch
          %672 = sbr.rel (%p670) target = $region80
        $region79: #{tpu_custom_call.1} parent=75 // pred_region
          %673 = dma.done [#allocation5], 64
        $region80: #{tpu_custom_call.1} parent=75 // pred_fallthru
          _
        // Predicated region
        $region81: #{tpu_custom_call.1} parent=75 // pred_check
          %p674 = pneg %p65
        $region82: #{tpu_custom_call.1} parent=75 // pred_check_branch
          %676 = sbr.rel (%p674) target = $region84
        $region83: #{tpu_custom_call.1} parent=75 // pred_region
          %677 = dma.done [#allocation8], 256
        $region84: #{tpu_custom_call.1} parent=75 // pred_fallthru
          _
        %s678 = sand.u32 %s28, 1
        %s679 = scalar_lea.sflag [#allocation5], %s678
        %s680 = sand.u32 %s78, 1
        %s681 = scalar_lea.vmem [#allocation9], %s680
        // Predicated region
        $region85: #{tpu_custom_call.1} parent=75 // pred_check
          %p682 = pneg %p91
        $region86: #{tpu_custom_call.1} parent=75 // pred_check_branch
          %684 = sbr.rel (%p682) target = $region88
        $region87: #{tpu_custom_call.1} parent=75 // pred_region
          %685 = dma.done %s679, 16
        $region88: #{tpu_custom_call.1} parent=75 // pred_fallthru
          _
        %s686 = sand.u32 %s28, 1
        %s687 = scalar_lea.sflag [#allocation5], %s686
        %s688 = sand.u32 %s104, 1
        %s689 = scalar_lea.vmem [#allocation10], %s688
        // Predicated region
        $region89: #{tpu_custom_call.1} parent=75 // pred_check
          %p690 = pneg %p117
        $region90: #{tpu_custom_call.1} parent=75 // pred_check_branch
          %692 = sbr.rel (%p690) target = $region92
        $region91: #{tpu_custom_call.1} parent=75 // pred_region
          %693 = dma.done %s687, 16
        $region92: #{tpu_custom_call.1} parent=75 // pred_fallthru
          _
        %s694 = sand.u32 %s28, 1
        %s695 = scalar_lea.sflag [#allocation5], %s694
        %s696 = sand.u32 %s130, 1
        %s697 = smul.addr %s696, 16
        %s698 = scalar_lea.vmem [#allocation11], %s697
        // Predicated region
        $region93: #{tpu_custom_call.1} parent=75 // pred_check
          %p699 = pneg %p143
        $region94: #{tpu_custom_call.1} parent=75 // pred_check_branch
          %701 = sbr.rel (%p699) target = $region96
        $region95: #{tpu_custom_call.1} parent=75 // pred_region
          %702 = dma.done %s695, 256
        $region96: #{tpu_custom_call.1} parent=75 // pred_fallthru
          _
        %s703 = sand.u32 %s28, 1
        %s704 = scalar_lea.sflag [#allocation5], %s703
        %s705 = sand.u32 %s156, 1
        %s706 = scalar_lea.vmem [#allocation12], %s705
        // Predicated region
        $region97: #{tpu_custom_call.1} parent=75 // pred_check
          %p707 = pneg %p169
        $region98: #{tpu_custom_call.1} parent=75 // pred_check_branch
          %709 = sbr.rel (%p707) target = $region100
        $region99: #{tpu_custom_call.1} parent=75 // pred_region
          %710 = dma.done %s704, 16
        $region100: #{tpu_custom_call.1} parent=75 // pred_fallthru
          _
        %s711 = sand.u32 %s28, 1
        %s712 = scalar_lea.sflag [#allocation5], %s711
        %s713 = sand.u32 %s182, 1
        %s714 = smul.addr %s713, 16
        %s715 = scalar_lea.vmem [#allocation13], %s714
        // Predicated region
        $region101: #{tpu_custom_call.1} parent=75 // pred_check
          %p716 = pneg %p195
        $region102: #{tpu_custom_call.1} parent=75 // pred_check_branch
          %718 = sbr.rel (%p716) target = $region104
        $region103: #{tpu_custom_call.1} parent=75 // pred_region
          %719 = dma.done %s712, 256
        $region104: #{tpu_custom_call.1} parent=75 // pred_fallthru
          _
        %s720 = sand.u32 %s28, 1
        %s721 = scalar_lea.sflag [#allocation5], %s720
        %s722 = sand.u32 %s208, 1
        %s723 = scalar_lea.vmem [#allocation14], %s722
        // Predicated region
        $region105: #{tpu_custom_call.1} parent=75 // pred_check
          %p724 = pneg %p221
        $region106: #{tpu_custom_call.1} parent=75 // pred_check_branch
          %726 = sbr.rel (%p724) target = $region108
        $region107: #{tpu_custom_call.1} parent=75 // pred_region
          %727 = dma.done %s721, 16
        $region108: #{tpu_custom_call.1} parent=75 // pred_fallthru
          _
        %s728 = sand.u32 %s28, 1
        %s729 = scalar_lea.sflag [#allocation5], %s728
        %s730 = sand.u32 %s234, 1
        %s731 = scalar_lea.vmem [#allocation15], %s730
        // Predicated region
        $region109: #{tpu_custom_call.1} parent=75 // pred_check
          %p732 = pneg %p247
        $region110: #{tpu_custom_call.1} parent=75 // pred_check_branch
          %734 = sbr.rel (%p732) target = $region112
        $region111: #{tpu_custom_call.1} parent=75 // pred_region
          %735 = dma.done %s729, 16
        $region112: #{tpu_custom_call.1} parent=75 // pred_fallthru
          _
        %s736 = sand.u32 %s28, 1
        %s737 = scalar_lea.sflag [#allocation5], %s736
        %s738 = sand.u32 %s260, 1
        %s739 = scalar_lea.vmem [#allocation16], %s738
        // Predicated region
        $region113: #{tpu_custom_call.1} parent=75 // pred_check
          %p740 = pneg %p273
        $region114: #{tpu_custom_call.1} parent=75 // pred_check_branch
          %742 = sbr.rel (%p740) target = $region116
        $region115: #{tpu_custom_call.1} parent=75 // pred_region
          %743 = dma.done %s737, 16
        $region116: #{tpu_custom_call.1} parent=75 // pred_fallthru
          _
        %s744 = sand.u32 %s28, 1
        %s745 = scalar_lea.sflag [#allocation5], %s744
        %s746 = sand.u32 %s286, 1
        %s747 = smul.addr %s746, 16
        %s748 = scalar_lea.vmem [#allocation17], %s747
        // Predicated region
        $region117: #{tpu_custom_call.1} parent=75 // pred_check
          %p749 = pneg %p299
        $region118: #{tpu_custom_call.1} parent=75 // pred_check_branch
          %751 = sbr.rel (%p749) target = $region120
        $region119: #{tpu_custom_call.1} parent=75 // pred_region
          %752 = dma.done %s745, 256
        $region120: #{tpu_custom_call.1} parent=75 // pred_fallthru
          _
        %s753 = sand.u32 %s28, 1
        %s754 = scalar_lea.sflag [#allocation5], %s753
        %s755 = sand.u32 %s312, 1
        %s756 = scalar_lea.vmem [#allocation18], %s755
        // Predicated region
        $region121: #{tpu_custom_call.1} parent=75 // pred_check
          %p757 = pneg %p325
        $region122: #{tpu_custom_call.1} parent=75 // pred_check_branch
          %759 = sbr.rel (%p757) target = $region124
        $region123: #{tpu_custom_call.1} parent=75 // pred_region
          %760 = dma.done %s754, 16
        $region124: #{tpu_custom_call.1} parent=75 // pred_fallthru
          _
        %s761 = sand.u32 %s28, 1
        %s762 = scalar_lea.sflag [#allocation5], %s761
        %s763 = sand.u32 %s338, 1
        %s764 = smul.addr %s763, 16
        %s765 = scalar_lea.vmem [#allocation19], %s764
        // Predicated region
        $region125: #{tpu_custom_call.1} parent=75 // pred_check
          %p766 = pneg %p351
        $region126: #{tpu_custom_call.1} parent=75 // pred_check_branch
          %768 = sbr.rel (%p766) target = $region128
        $region127: #{tpu_custom_call.1} parent=75 // pred_region
          %769 = dma.done %s762, 256
        $region128: #{tpu_custom_call.1} parent=75 // pred_fallthru
          _
        %s770 = sand.u32 %s28, 1
        %s771 = scalar_lea.sflag [#allocation5], %s770
        %s772 = sand.u32 %s364, 1
        %s773 = scalar_lea.vmem [#allocation20], %s772
        // Predicated region
        $region129: #{tpu_custom_call.1} parent=75 // pred_check
          %p774 = pneg %p377
        $region130: #{tpu_custom_call.1} parent=75 // pred_check_branch
          %776 = sbr.rel (%p774) target = $region132
        $region131: #{tpu_custom_call.1} parent=75 // pred_region
          %777 = dma.done %s771, 16
        $region132: #{tpu_custom_call.1} parent=75 // pred_fallthru
          _
        %p778 = pneg %p44
        %p779 = pneg %p41
        %p780 = pneg %p65
        %p781 = pneg %p62
        %s782 = sand.u32 %s28, 1
        %s783 = scalar_lea.sflag [#allocation5], %s782
        %s784 = sand.u32 %s78, 1
        %s785 = scalar_lea.vmem [#allocation9], %s784
        %p786 = pneg %p91
        %p787 = pneg %p88
        %s788 = sand.u32 %s28, 1
        %s789 = scalar_lea.sflag [#allocation5], %s788
        %s790 = sand.u32 %s104, 1
        %s791 = scalar_lea.vmem [#allocation10], %s790
        %p792 = pneg %p117
        %p793 = pneg %p114
        %s794 = sand.u32 %s28, 1
        %s795 = scalar_lea.sflag [#allocation5], %s794
        %s796 = sand.u32 %s130, 1
        %s797 = smul.addr %s796, 16
        %s798 = scalar_lea.vmem [#allocation11], %s797
        %p799 = pneg %p143
        %p800 = pneg %p140
        %s801 = sand.u32 %s28, 1
        %s802 = scalar_lea.sflag [#allocation5], %s801
        %s803 = sand.u32 %s156, 1
        %s804 = scalar_lea.vmem [#allocation12], %s803
        %p805 = pneg %p169
        %p806 = pneg %p166
        %s807 = sand.u32 %s28, 1
        %s808 = scalar_lea.sflag [#allocation5], %s807
        %s809 = sand.u32 %s182, 1
        %s810 = smul.addr %s809, 16
        %s811 = scalar_lea.vmem [#allocation13], %s810
        %p812 = pneg %p195
        %p813 = pneg %p192
        %s814 = sand.u32 %s28, 1
        %s815 = scalar_lea.sflag [#allocation5], %s814
        %s816 = sand.u32 %s208, 1
        %s817 = scalar_lea.vmem [#allocation14], %s816
        %p818 = pneg %p221
        %p819 = pneg %p218
        %s820 = sand.u32 %s28, 1
        %s821 = scalar_lea.sflag [#allocation5], %s820
        %s822 = sand.u32 %s234, 1
        %s823 = scalar_lea.vmem [#allocation15], %s822
        %p824 = pneg %p247
        %p825 = pneg %p244
        %s826 = sand.u32 %s28, 1
        %s827 = scalar_lea.sflag [#allocation5], %s826
        %s828 = sand.u32 %s260, 1
        %s829 = scalar_lea.vmem [#allocation16], %s828
        %p830 = pneg %p273
        %p831 = pneg %p270
        %s832 = sand.u32 %s28, 1
        %s833 = scalar_lea.sflag [#allocation5], %s832
        %s834 = sand.u32 %s286, 1
        %s835 = smul.addr %s834, 16
        %s836 = scalar_lea.vmem [#allocation17], %s835
        %p837 = pneg %p299
        %p838 = pneg %p296
        %s839 = sand.u32 %s28, 1
        %s840 = scalar_lea.sflag [#allocation5], %s839
        %s841 = sand.u32 %s312, 1
        %s842 = scalar_lea.vmem [#allocation18], %s841
        %p843 = pneg %p325
        %p844 = pneg %p322
        %s845 = sand.u32 %s28, 1
        %s846 = scalar_lea.sflag [#allocation5], %s845
        %s847 = sand.u32 %s338, 1
        %s848 = smul.addr %s847, 16
        %s849 = scalar_lea.vmem [#allocation19], %s848
        %p850 = pneg %p351
        %p851 = pneg %p348
        %s852 = sand.u32 %s28, 1
        %s853 = scalar_lea.sflag [#allocation5], %s852
        %s854 = sand.u32 %s364, 1
        %s855 = scalar_lea.vmem [#allocation20], %s854
        %p856 = pneg %p377
        %p857 = pneg %p374
        %p858 = pneg %p398
        %p859 = pneg %p395
        %p861 = scmp.eq.s32.totalorder %s28, 0
        // Predicated region
        $region133: #{tpu_custom_call.1} parent=75 // pred_check
          %p862 = pneg %p861
        $region134: #{tpu_custom_call.1} parent=75 // pred_check_branch
          %864 = sbr.rel (%p862) target = $region136
        $region135: #{tpu_custom_call.1} parent=75 // pred_region
          %v865 = vld [vmem:[#allocation7] sm:$0xff]
          %v866 = vld [vmem:[#allocation7 + $0x8] sm:$0xff]
          %vm867 = vcmask 261120
          %868 = vst.msk [vmem:[#allocation21] sm:$0xff] %vm867, %v865
          %869 = vst.msk [vmem:[#allocation21 + $0x8] sm:$0xff] %vm867, %v866
          %v870 = vld [vmem:[#allocation4] sm:$0x3]
          %v871 = vld [vmem:[#allocation4 + $0x2] sm:$0x3]
          %v872 = vunpack.c.0.s8 %v870
          %v873 = vunpack.c.0.s8 %v871
          %v874 = vcvt.s32.f32 %v872
          %v875 = vcvt.s32.f32 %v873
          %v876 = vmul.f32 %v874, -1e+09
          %v877 = vmul.f32 %v875, -1e+09
          %vm878 = vcmask 130048
          %879 = vst.msk [vmem:[#allocation2] sm:$0xff] %vm878, %v876
          %880 = vst.msk [vmem:[#allocation2 + $0x8] sm:$0xff] %vm878, %v877
        $region136: #{tpu_custom_call.1} parent=75 // pred_fallthru
          _
        %v881 = vld [vmem:[#allocation21] sm:$0xff]
        %v882 = vld [vmem:[#allocation21 + $0x8] sm:$0xff]
        %v883 = vld [vmem:[%s681] sm:$0x1]
        %v884 = vld [vmem:[%s689] sm:$0x1]
        %vm885 = vcmask 261120
        %v886 = vsel %vm885, %v881, 0.0
        %887 = vadd.xlane.f32.xlu0 %v886
        %v888 = vpop.xlane.xlu0 %887
        %v889 = vsel %vm885, %v882, 0.0
        %890 = vadd.xlane.f32.xlu0 %v889
        %v891 = vpop.xlane.xlu0 %890
        %v892 = vrcp.pop 32.0
        %v893 = vmul.f32 %v888, %v892
        %v894 = vmul.f32 %v891, %v892
        %v895 = vsub.f32 %v881, %v893
        %v896 = vsub.f32 %v882, %v894
        %v897 = vmul.f32 %v895, %v895
        %v898 = vmul.f32 %v896, %v896
        %v899 = vsel %vm885, %v897, 0.0
        %900 = vadd.xlane.f32.xlu0 %v899
        %v901 = vpop.xlane.xlu0 %900
        %v902 = vsel %vm885, %v898, 0.0
        %903 = vadd.xlane.f32.xlu0 %v902
        %v904 = vpop.xlane.xlu0 %903
        %v905 = vmul.f32 %v901, %v892
        %v906 = vmul.f32 %v904, %v892
        %v907 = vadd.f32 %v905, 1e-05
        %v908 = vadd.f32 %v906, 1e-05
        %v909 = vrsqrt.pop %v907
        %v910 = vrsqrt.pop %v908
        %v911 = vmul.f32 %v895, %v909
        %v912 = vmul.f32 %v896, %v910
        %v914 = vlaneseq
        %v915 = vshrl.u32 %v914, 7
        %v916 = vsub.s32 0, %v915
        %v917 = vrot.slane %v883, %v916
        %v919 = vmul.f32 %v911, %v917
        %v920 = vmul.f32 %v912, %v917
        %v922 = vlaneseq
        %v923 = vshrl.u32 %v922, 7
        %v924 = vsub.s32 0, %v923
        %v925 = vrot.slane %v884, %v924
        %v927 = vadd.f32 %v919, %v925
        %v928 = vadd.f32 %v920, %v925
        %v929 = vpack.c.bf16 %v928, %v927
        %v930 = vld [vmem:[%s698] sm:$0xf]
        %v931 = vld [vmem:[%s698 + $0x4] sm:$0xf]
        %v932 = vld [vmem:[%s698 + $0x8] sm:$0xf]
        %v933 = vld [vmem:[%s698 + $0xc] sm:$0xf]
        %v934 = vld [vmem:[%s706] sm:$0x1]
        %v936 = vlaneseq
        %v937 = vshrl.u32 %v936, 7
        %v938 = vsub.s32 0, %v937
        %v939 = vrot.slane %v934, %v938
        %v945 = vunpack.c.l.b16 %v930
        %v946 = vunpack.c.l.b16 %v931
        %v947 = vunpack.c.l.b16 %v932
        %v948 = vunpack.c.l.b16 %v933
        %v949 = vpack.c.b16 %v946, %v945
        %v950 = vpack.c.b16 %v948, %v947
        %v954 = vsel %vm885, %v929, 0
        %956 = vmatprep.subr.bf16.mxu0 0
        %957 = vmatpush1.bf16.msra.mxu0 %v949
        %958 = vmatprep.subr.bf16.mxu0 0
        %959 = vmatpush1.bf16.msra.mxu0 %v950
        %960 = vmatprep.subr.bf16.mxu0 0
        %961 = vmatpush1.bf16.msra.mxu0 0
        %962 = vmatprep.subr.bf16.mxu0 0
        %963 = vmatpush1.bf16.msra.mxu0 0
        %964 = vmatprep.subr.bf16.mxu0 0
        %965 = vmatpush1.bf16.msra.mxu0 0
        %966 = vmatprep.subr.bf16.mxu0 0
        %967 = vmatpush1.bf16.msra.mxu0 0
        %968 = vmatprep.subr.bf16.mxu0 0
        %969 = vmatpush1.bf16.msra.mxu0 0
        %970 = vmatprep.subr.bf16.mxu0 0
        %971 = vmatpush1.bf16.msra.mxu0 0
        %972 = vmatprep.subr.bf16.mxu0 0
        %973 = vmatpush1.bf16.msra.mxu0 0
        %974 = vmatprep.subr.bf16.mxu0 0
        %975 = vmatpush1.bf16.msra.mxu0 0
        %976 = vmatprep.subr.bf16.mxu0 0
        %977 = vmatpush1.bf16.msra.mxu0 0
        %978 = vmatprep.subr.bf16.mxu0 0
        %979 = vmatpush1.bf16.msra.mxu0 0
        %980 = vmatprep.subr.bf16.mxu0 0
        %981 = vmatpush1.bf16.msra.mxu0 0
        %982 = vmatprep.subr.bf16.mxu0 0
        %983 = vmatpush1.bf16.msra.mxu0 0
        %984 = vmatprep.subr.bf16.mxu0 0
        %985 = vmatpush1.bf16.msra.mxu0 0
        %986 = vmatprep.subr.bf16.mxu0 0
        %987 = vmatpush1.bf16.msra.mxu0 0
        %988 = vmatprep.mubr.bf16.mxu0 0
        %989 = vmatmul.mubr.bf16.gmra.mrb[0].mxu0 %v954
        %v990 = vpop.f32.mrb[0].mxu0
        %v991 = vadd.f32 %v939, %v990
        %v992 = vpop.f32.mrb[0].mxu0
        %v993 = vpop.f32.mrb[0].mxu0
        %v994 = vadd.f32 %v939, %v993
        %v995 = vpop.f32.mrb[0].mxu0
        %996 = vdwg.mxu0
        %v997 = vpack.c.bf16 %v994, %v991
        %vm998 = vcmask 785408
        %999 = vst.msk [vmem:[#allocation3] sm:$0xff] %vm998, %v997
        %v1000 = vld [vmem:[#allocation21] sm:$0xff]
        %v1001 = vld [vmem:[#allocation21 + $0x8] sm:$0xff]
        %v1002 = vld [vmem:[#allocation2] sm:$0xff]
        %v1003 = vld [vmem:[#allocation2 + $0x8] sm:$0xff]
        %v1004 = vld [vmem:[#allocation3] sm:$0xff]
        %1006 = vrot.lane.b32.xlu0 %v1004, 96
        %v1007 = vpop.permute.xlu0 %1006
        %vm1008 = vcmask 64512
        %v1010 = vsel %vm1008, %v1004, 0
        %v1013 = vsel %vm1008, %v1007, 0
        %1015 = vmatprep.subr.bf16.mxu0 0
        %1016 = vmatpush1.bf16.xpose.msra.mxu0 %v1013
        %1017 = vmatprep.subr.bf16.mxu0 0
        %1018 = vmatpush1.bf16.xpose.msra.mxu0 0
        %1019 = vmatprep.subr.bf16.mxu0 0
        %1020 = vmatpush1.bf16.xpose.msra.mxu0 0
        %1021 = vmatprep.subr.bf16.mxu0 0
        %1022 = vmatpush1.bf16.xpose.msra.mxu0 0
        %1023 = vmatprep.subr.bf16.mxu0 0
        %1024 = vmatpush1.bf16.xpose.msra.mxu0 0
        %1025 = vmatprep.subr.bf16.mxu0 0
        %1026 = vmatpush1.bf16.xpose.msra.mxu0 0
        %1027 = vmatprep.subr.bf16.mxu0 0
        %1028 = vmatpush1.bf16.xpose.msra.mxu0 0
        %1029 = vmatprep.subr.bf16.mxu0 0
        %1030 = vmatpush1.bf16.xpose.msra.mxu0 0
        %1031 = vmatprep.subr.bf16.mxu0 0
        %1032 = vmatpush1.bf16.xpose.msra.mxu0 0
        %1033 = vmatprep.subr.bf16.mxu0 0
        %1034 = vmatpush1.bf16.xpose.msra.mxu0 0
        %1035 = vmatprep.subr.bf16.mxu0 0
        %1036 = vmatpush1.bf16.xpose.msra.mxu0 0
        %1037 = vmatprep.subr.bf16.mxu0 0
        %1038 = vmatpush1.bf16.xpose.msra.mxu0 0
        %1039 = vmatprep.subr.bf16.mxu0 0
        %1040 = vmatpush1.bf16.xpose.msra.mxu0 0
        %1041 = vmatprep.subr.bf16.mxu0 0
        %1042 = vmatpush1.bf16.xpose.msra.mxu0 0
        %1043 = vmatprep.subr.bf16.mxu0 0
        %1044 = vmatpush1.bf16.xpose.msra.mxu0 0
        %1045 = vmatprep.subr.bf16.mxu0 0
        %1046 = vmatpush1.bf16.xpose.msra.mxu0 0
        %1047 = vmatprep.mubr.bf16.mxu0 0
        %1048 = vmatmul.mubr.bf16.gmra.mrb[0].mxu0 %v1010
        %v1049 = vpop.f32.mrb[0].mxu0
        %v1050 = vadd.f32 %v1002, %v1049
        %v1051 = vpop.f32.mrb[0].mxu0
        %v1052 = vpop.f32.mrb[0].mxu0
        %v1053 = vadd.f32 %v1003, %v1052
        %v1054 = vpop.f32.mrb[0].mxu0
        %1055 = vdwg.mxu0
        %vm1056 = vcmask 130048
        %v1057 = vsel %vm1056, %v1050, -inf
        %1058 = vmax.xlane.f32.xlu0 %v1057
        %v1059 = vpop.xlane.xlu0 %1058
        %v1060 = vsel %vm1056, %v1053, -inf
        %1061 = vmax.xlane.f32.xlu0 %v1060
        %v1062 = vpop.xlane.xlu0 %1061
        %v1063 = vsub.f32 %v1050, %v1059
        %v1064 = vsub.f32 %v1053, %v1062
        %v1065 = vmul.f32 %v1063, 1.442695
        %v1066 = vpow.pop %v1065
        %v1067 = vmul.f32 %v1064, 1.442695
        %v1068 = vpow.pop %v1067
        %v1069 = vsel %vm1056, %v1066, 0.0
        %1070 = vadd.xlane.f32.xlu0 %v1069
        %v1071 = vpop.xlane.xlu0 %1070
        %v1072 = vsel %vm1056, %v1068, 0.0
        %1073 = vadd.xlane.f32.xlu0 %v1072
        %v1074 = vpop.xlane.xlu0 %1073
        %v1075 = vrcp.pop %v1071
        %v1076 = vrcp.pop %v1074
        %v1077 = vmul.f32 %v1066, %v1075
        %v1078 = vmul.f32 %v1068, %v1076
        %v1079 = vpack.c.bf16 %v1078, %v1077
        %1080 = vrot.lane.b32.xlu0 %v1004, 64
        %v1081 = vpop.permute.xlu0 %1080
        %v1084 = vsel %vm1056, %v1079, 0
        %1086 = vmatprep.subr.bf16.mxu0 0
        %1087 = vmatpush1.bf16.msra.mxu0 %v1081
        %1088 = vmatprep.subr.bf16.mxu0 0
        %1089 = vmatpush1.bf16.msra.mxu0 0
        %1090 = vmatprep.subr.bf16.mxu0 0
        %1091 = vmatpush1.bf16.msra.mxu0 0
        %1092 = vmatprep.subr.bf16.mxu0 0
        %1093 = vmatpush1.bf16.msra.mxu0 0
        %1094 = vmatprep.subr.bf16.mxu0 0
        %1095 = vmatpush1.bf16.msra.mxu0 0
        %1096 = vmatprep.subr.bf16.mxu0 0
        %1097 = vmatpush1.bf16.msra.mxu0 0
        %1098 = vmatprep.subr.bf16.mxu0 0
        %1099 = vmatpush1.bf16.msra.mxu0 0
        %1100 = vmatprep.subr.bf16.mxu0 0
        %1101 = vmatpush1.bf16.msra.mxu0 0
        %1102 = vmatprep.subr.bf16.mxu0 0
        %1103 = vmatpush1.bf16.msra.mxu0 0
        %1104 = vmatprep.subr.bf16.mxu0 0
        %1105 = vmatpush1.bf16.msra.mxu0 0
        %1106 = vmatprep.subr.bf16.mxu0 0
        %1107 = vmatpush1.bf16.msra.mxu0 0
        %1108 = vmatprep.subr.bf16.mxu0 0
        %1109 = vmatpush1.bf16.msra.mxu0 0
        %1110 = vmatprep.subr.bf16.mxu0 0
        %1111 = vmatpush1.bf16.msra.mxu0 0
        %1112 = vmatprep.subr.bf16.mxu0 0
        %1113 = vmatpush1.bf16.msra.mxu0 0
        %1114 = vmatprep.subr.bf16.mxu0 0
        %1115 = vmatpush1.bf16.msra.mxu0 0
        %1116 = vmatprep.subr.bf16.mxu0 0
        %1117 = vmatpush1.bf16.msra.mxu0 0
        %1118 = vmatprep.mubr.bf16.mxu0 0
        %1119 = vmatmul.mubr.bf16.gmra.mrb[0].mxu0 %v1084
        %v1120 = vpop.f32.mrb[0].mxu0
        %v1121 = vadd.f32 0.0, %v1120
        %v1122 = vpop.f32.mrb[0].mxu0
        %v1123 = vpop.f32.mrb[0].mxu0
        %v1124 = vadd.f32 0.0, %v1123
        %v1125 = vpop.f32.mrb[0].mxu0
        %1126 = vdwg.mxu0
        %v1127 = vld [vmem:[#allocation3] sm:$0xff]
        %1128 = vrot.lane.b32.xlu0 %v1004, 120
        %v1129 = vpop.permute.xlu0 %1128
        %1131 = vrot.lane.b32.xlu0 %v1127, 88
        %v1132 = vpop.permute.xlu0 %1131
        %v1134 = vsel %vm1008, %v1129, 0
        %v1137 = vsel %vm1008, %v1132, 0
        %1139 = vmatprep.subr.bf16.mxu0 0
        %1140 = vmatpush1.bf16.xpose.msra.mxu0 %v1137
        %1141 = vmatprep.subr.bf16.mxu0 0
        %1142 = vmatpush1.bf16.xpose.msra.mxu0 0
        %1143 = vmatprep.subr.bf16.mxu0 0
        %1144 = vmatpush1.bf16.xpose.msra.mxu0 0
        %1145 = vmatprep.subr.bf16.mxu0 0
        %1146 = vmatpush1.bf16.xpose.msra.mxu0 0
        %1147 = vmatprep.subr.bf16.mxu0 0
        %1148 = vmatpush1.bf16.xpose.msra.mxu0 0
        %1149 = vmatprep.subr.bf16.mxu0 0
        %1150 = vmatpush1.bf16.xpose.msra.mxu0 0
        %1151 = vmatprep.subr.bf16.mxu0 0
        %1152 = vmatpush1.bf16.xpose.msra.mxu0 0
        %1153 = vmatprep.subr.bf16.mxu0 0
        %1154 = vmatpush1.bf16.xpose.msra.mxu0 0
        %1155 = vmatprep.subr.bf16.mxu0 0
        %1156 = vmatpush1.bf16.xpose.msra.mxu0 0
        %1157 = vmatprep.subr.bf16.mxu0 0
        %1158 = vmatpush1.bf16.xpose.msra.mxu0 0
        %1159 = vmatprep.subr.bf16.mxu0 0
        %1160 = vmatpush1.bf16.xpose.msra.mxu0 0
        %1161 = vmatprep.subr.bf16.mxu0 0
        %1162 = vmatpush1.bf16.xpose.msra.mxu0 0
        %1163 = vmatprep.subr.bf16.mxu0 0
        %1164 = vmatpush1.bf16.xpose.msra.mxu0 0
        %1165 = vmatprep.subr.bf16.mxu0 0
        %1166 = vmatpush1.bf16.xpose.msra.mxu0 0
        %1167 = vmatprep.subr.bf16.mxu0 0
        %1168 = vmatpush1.bf16.xpose.msra.mxu0 0
        %1169 = vmatprep.subr.bf16.mxu0 0
        %1170 = vmatpush1.bf16.xpose.msra.mxu0 0
        %1171 = vmatprep.mubr.bf16.mxu0 0
        %1172 = vmatmul.mubr.bf16.gmra.mrb[0].mxu0 %v1134
        %v1173 = vpop.f32.mrb[0].mxu0
        %v1174 = vadd.f32 %v1002, %v1173
        %v1175 = vpop.f32.mrb[0].mxu0
        %v1176 = vpop.f32.mrb[0].mxu0
        %v1177 = vadd.f32 %v1003, %v1176
        %v1178 = vpop.f32.mrb[0].mxu0
        %1179 = vdwg.mxu0
        %v1180 = vsel %vm1056, %v1174, -inf
        %1181 = vmax.xlane.f32.xlu0 %v1180
        %v1182 = vpop.xlane.xlu0 %1181
        %v1183 = vsel %vm1056, %v1177, -inf
        %1184 = vmax.xlane.f32.xlu0 %v1183
        %v1185 = vpop.xlane.xlu0 %1184
        %v1186 = vsub.f32 %v1174, %v1182
        %v1187 = vsub.f32 %v1177, %v1185
        %v1188 = vmul.f32 %v1186, 1.442695
        %v1189 = vpow.pop %v1188
        %v1190 = vmul.f32 %v1187, 1.442695
        %v1191 = vpow.pop %v1190
        %v1192 = vsel %vm1056, %v1189, 0.0
        %1193 = vadd.xlane.f32.xlu0 %v1192
        %v1194 = vpop.xlane.xlu0 %1193
        %v1195 = vsel %vm1056, %v1191, 0.0
        %1196 = vadd.xlane.f32.xlu0 %v1195
        %v1197 = vpop.xlane.xlu0 %1196
        %v1198 = vrcp.pop %v1194
        %v1199 = vrcp.pop %v1197
        %v1200 = vmul.f32 %v1189, %v1198
        %v1201 = vmul.f32 %v1191, %v1199
        %v1202 = vpack.c.bf16 %v1201, %v1200
        %1203 = vrot.lane.b32.xlu0 %v1127, 56
        %v1204 = vpop.permute.xlu0 %1203
        %v1207 = vsel %vm1056, %v1202, 0
        %1209 = vmatprep.subr.bf16.mxu0 0
        %1210 = vmatpush1.bf16.msra.mxu0 %v1204
        %1211 = vmatprep.subr.bf16.mxu0 0
        %1212 = vmatpush1.bf16.msra.mxu0 0
        %1213 = vmatprep.subr.bf16.mxu0 0
        %1214 = vmatpush1.bf16.msra.mxu0 0
        %1215 = vmatprep.subr.bf16.mxu0 0
        %1216 = vmatpush1.bf16.msra.mxu0 0
        %1217 = vmatprep.subr.bf16.mxu0 0
        %1218 = vmatpush1.bf16.msra.mxu0 0
        %1219 = vmatprep.subr.bf16.mxu0 0
        %1220 = vmatpush1.bf16.msra.mxu0 0
        %1221 = vmatprep.subr.bf16.mxu0 0
        %1222 = vmatpush1.bf16.msra.mxu0 0
        %1223 = vmatprep.subr.bf16.mxu0 0
        %1224 = vmatpush1.bf16.msra.mxu0 0
        %1225 = vmatprep.subr.bf16.mxu0 0
        %1226 = vmatpush1.bf16.msra.mxu0 0
        %1227 = vmatprep.subr.bf16.mxu0 0
        %1228 = vmatpush1.bf16.msra.mxu0 0
        %1229 = vmatprep.subr.bf16.mxu0 0
        %1230 = vmatpush1.bf16.msra.mxu0 0
        %1231 = vmatprep.subr.bf16.mxu0 0
        %1232 = vmatpush1.bf16.msra.mxu0 0
        %1233 = vmatprep.subr.bf16.mxu0 0
        %1234 = vmatpush1.bf16.msra.mxu0 0
        %1235 = vmatprep.subr.bf16.mxu0 0
        %1236 = vmatpush1.bf16.msra.mxu0 0
        %1237 = vmatprep.subr.bf16.mxu0 0
        %1238 = vmatpush1.bf16.msra.mxu0 0
        %1239 = vmatprep.subr.bf16.mxu0 0
        %1240 = vmatpush1.bf16.msra.mxu0 0
        %1241 = vmatprep.mubr.bf16.mxu0 0
        %1242 = vmatmul.mubr.bf16.gmra.mrb[0].mxu0 %v1207
        %v1243 = vpop.f32.mrb[0].mxu0
        %v1244 = vadd.f32 0.0, %v1243
        %v1245 = vpop.f32.mrb[0].mxu0
        %v1246 = vpop.f32.mrb[0].mxu0
        %v1247 = vadd.f32 0.0, %v1246
        %v1248 = vpop.f32.mrb[0].mxu0
        %1249 = vdwg.mxu0
        %v1250 = vld [vmem:[#allocation3] sm:$0xff]
        %1251 = vrot.lane.b32.xlu0 %v1004, 112
        %v1252 = vpop.permute.xlu0 %1251
        %1254 = vrot.lane.b32.xlu0 %v1250, 80
        %v1255 = vpop.permute.xlu0 %1254
        %v1257 = vsel %vm1008, %v1252, 0
        %v1260 = vsel %vm1008, %v1255, 0
        %1262 = vmatprep.subr.bf16.mxu0 0
        %1263 = vmatpush1.bf16.xpose.msra.mxu0 %v1260
        %1264 = vmatprep.subr.bf16.mxu0 0
        %1265 = vmatpush1.bf16.xpose.msra.mxu0 0
        %1266 = vmatprep.subr.bf16.mxu0 0
        %1267 = vmatpush1.bf16.xpose.msra.mxu0 0
        %1268 = vmatprep.subr.bf16.mxu0 0
        %1269 = vmatpush1.bf16.xpose.msra.mxu0 0
        %1270 = vmatprep.subr.bf16.mxu0 0
        %1271 = vmatpush1.bf16.xpose.msra.mxu0 0
        %1272 = vmatprep.subr.bf16.mxu0 0
        %1273 = vmatpush1.bf16.xpose.msra.mxu0 0
        %1274 = vmatprep.subr.bf16.mxu0 0
        %1275 = vmatpush1.bf16.xpose.msra.mxu0 0
        %1276 = vmatprep.subr.bf16.mxu0 0
        %1277 = vmatpush1.bf16.xpose.msra.mxu0 0
        %1278 = vmatprep.subr.bf16.mxu0 0
        %1279 = vmatpush1.bf16.xpose.msra.mxu0 0
        %1280 = vmatprep.subr.bf16.mxu0 0
        %1281 = vmatpush1.bf16.xpose.msra.mxu0 0
        %1282 = vmatprep.subr.bf16.mxu0 0
        %1283 = vmatpush1.bf16.xpose.msra.mxu0 0
        %1284 = vmatprep.subr.bf16.mxu0 0
        %1285 = vmatpush1.bf16.xpose.msra.mxu0 0
        %1286 = vmatprep.subr.bf16.mxu0 0
        %1287 = vmatpush1.bf16.xpose.msra.mxu0 0
        %1288 = vmatprep.subr.bf16.mxu0 0
        %1289 = vmatpush1.bf16.xpose.msra.mxu0 0
        %1290 = vmatprep.subr.bf16.mxu0 0
        %1291 = vmatpush1.bf16.xpose.msra.mxu0 0
        %1292 = vmatprep.subr.bf16.mxu0 0
        %1293 = vmatpush1.bf16.xpose.msra.mxu0 0
        %1294 = vmatprep.mubr.bf16.mxu0 0
        %1295 = vmatmul.mubr.bf16.gmra.mrb[0].mxu0 %v1257
        %v1296 = vpop.f32.mrb[0].mxu0
        %v1297 = vadd.f32 %v1002, %v1296
        %v1298 = vpop.f32.mrb[0].mxu0
        %v1299 = vpop.f32.mrb[0].mxu0
        %v1300 = vadd.f32 %v1003, %v1299
        %v1301 = vpop.f32.mrb[0].mxu0
        %1302 = vdwg.mxu0
        %v1303 = vsel %vm1056, %v1297, -inf
        %1304 = vmax.xlane.f32.xlu0 %v1303
        %v1305 = vpop.xlane.xlu0 %1304
        %v1306 = vsel %vm1056, %v1300, -inf
        %1307 = vmax.xlane.f32.xlu0 %v1306
        %v1308 = vpop.xlane.xlu0 %1307
        %v1309 = vsub.f32 %v1297, %v1305
        %v1310 = vsub.f32 %v1300, %v1308
        %v1311 = vmul.f32 %v1309, 1.442695
        %v1312 = vpow.pop %v1311
        %v1313 = vmul.f32 %v1310, 1.442695
        %v1314 = vpow.pop %v1313
        %v1315 = vsel %vm1056, %v1312, 0.0
        %1316 = vadd.xlane.f32.xlu0 %v1315
        %v1317 = vpop.xlane.xlu0 %1316
        %v1318 = vsel %vm1056, %v1314, 0.0
        %1319 = vadd.xlane.f32.xlu0 %v1318
        %v1320 = vpop.xlane.xlu0 %1319
        %v1321 = vrcp.pop %v1317
        %v1322 = vrcp.pop %v1320
        %v1323 = vmul.f32 %v1312, %v1321
        %v1324 = vmul.f32 %v1314, %v1322
        %v1325 = vpack.c.bf16 %v1324, %v1323
        %1326 = vrot.lane.b32.xlu0 %v1250, 48
        %v1327 = vpop.permute.xlu0 %1326
        %v1330 = vsel %vm1056, %v1325, 0
        %1332 = vmatprep.subr.bf16.mxu0 0
        %1333 = vmatpush1.bf16.msra.mxu0 %v1327
        %1334 = vmatprep.subr.bf16.mxu0 0
        %1335 = vmatpush1.bf16.msra.mxu0 0
        %1336 = vmatprep.subr.bf16.mxu0 0
        %1337 = vmatpush1.bf16.msra.mxu0 0
        %1338 = vmatprep.subr.bf16.mxu0 0
        %1339 = vmatpush1.bf16.msra.mxu0 0
        %1340 = vmatprep.subr.bf16.mxu0 0
        %1341 = vmatpush1.bf16.msra.mxu0 0
        %1342 = vmatprep.subr.bf16.mxu0 0
        %1343 = vmatpush1.bf16.msra.mxu0 0
        %1344 = vmatprep.subr.bf16.mxu0 0
        %1345 = vmatpush1.bf16.msra.mxu0 0
        %1346 = vmatprep.subr.bf16.mxu0 0
        %1347 = vmatpush1.bf16.msra.mxu0 0
        %1348 = vmatprep.subr.bf16.mxu0 0
        %1349 = vmatpush1.bf16.msra.mxu0 0
        %1350 = vmatprep.subr.bf16.mxu0 0
        %1351 = vmatpush1.bf16.msra.mxu0 0
        %1352 = vmatprep.subr.bf16.mxu0 0
        %1353 = vmatpush1.bf16.msra.mxu0 0
        %1354 = vmatprep.subr.bf16.mxu0 0
        %1355 = vmatpush1.bf16.msra.mxu0 0
        %1356 = vmatprep.subr.bf16.mxu0 0
        %1357 = vmatpush1.bf16.msra.mxu0 0
        %1358 = vmatprep.subr.bf16.mxu0 0
        %1359 = vmatpush1.bf16.msra.mxu0 0
        %1360 = vmatprep.subr.bf16.mxu0 0
        %1361 = vmatpush1.bf16.msra.mxu0 0
        %1362 = vmatprep.subr.bf16.mxu0 0
        %1363 = vmatpush1.bf16.msra.mxu0 0
        %1364 = vmatprep.mubr.bf16.mxu0 0
        %1365 = vmatmul.mubr.bf16.gmra.mrb[0].mxu0 %v1330
        %v1366 = vpop.f32.mrb[0].mxu0
        %v1367 = vadd.f32 0.0, %v1366
        %v1368 = vpop.f32.mrb[0].mxu0
        %v1369 = vpop.f32.mrb[0].mxu0
        %v1370 = vadd.f32 0.0, %v1369
        %v1371 = vpop.f32.mrb[0].mxu0
        %1372 = vdwg.mxu0
        %v1373 = vld [vmem:[#allocation3] sm:$0xff]
        %1374 = vrot.lane.b32.xlu0 %v1004, 104
        %v1375 = vpop.permute.xlu0 %1374
        %1377 = vrot.lane.b32.xlu0 %v1373, 72
        %v1378 = vpop.permute.xlu0 %1377
        %v1380 = vsel %vm1008, %v1375, 0
        %v1383 = vsel %vm1008, %v1378, 0
        %1385 = vmatprep.subr.bf16.mxu0 0
        %1386 = vmatpush1.bf16.xpose.msra.mxu0 %v1383
        %1387 = vmatprep.subr.bf16.mxu0 0
        %1388 = vmatpush1.bf16.xpose.msra.mxu0 0
        %1389 = vmatprep.subr.bf16.mxu0 0
        %1390 = vmatpush1.bf16.xpose.msra.mxu0 0
        %1391 = vmatprep.subr.bf16.mxu0 0
        %1392 = vmatpush1.bf16.xpose.msra.mxu0 0
        %1393 = vmatprep.subr.bf16.mxu0 0
        %1394 = vmatpush1.bf16.xpose.msra.mxu0 0
        %1395 = vmatprep.subr.bf16.mxu0 0
        %1396 = vmatpush1.bf16.xpose.msra.mxu0 0
        %1397 = vmatprep.subr.bf16.mxu0 0
        %1398 = vmatpush1.bf16.xpose.msra.mxu0 0
        %1399 = vmatprep.subr.bf16.mxu0 0
        %1400 = vmatpush1.bf16.xpose.msra.mxu0 0
        %1401 = vmatprep.subr.bf16.mxu0 0
        %1402 = vmatpush1.bf16.xpose.msra.mxu0 0
        %1403 = vmatprep.subr.bf16.mxu0 0
        %1404 = vmatpush1.bf16.xpose.msra.mxu0 0
        %1405 = vmatprep.subr.bf16.mxu0 0
        %1406 = vmatpush1.bf16.xpose.msra.mxu0 0
        %1407 = vmatprep.subr.bf16.mxu0 0
        %1408 = vmatpush1.bf16.xpose.msra.mxu0 0
        %1409 = vmatprep.subr.bf16.mxu0 0
        %1410 = vmatpush1.bf16.xpose.msra.mxu0 0
        %1411 = vmatprep.subr.bf16.mxu0 0
        %1412 = vmatpush1.bf16.xpose.msra.mxu0 0
        %1413 = vmatprep.subr.bf16.mxu0 0
        %1414 = vmatpush1.bf16.xpose.msra.mxu0 0
        %1415 = vmatprep.subr.bf16.mxu0 0
        %1416 = vmatpush1.bf16.xpose.msra.mxu0 0
        %1417 = vmatprep.mubr.bf16.mxu0 0
        %1418 = vmatmul.mubr.bf16.gmra.mrb[0].mxu0 %v1380
        %v1419 = vpop.f32.mrb[0].mxu0
        %v1420 = vadd.f32 %v1002, %v1419
        %v1421 = vpop.f32.mrb[0].mxu0
        %v1422 = vpop.f32.mrb[0].mxu0
        %v1423 = vadd.f32 %v1003, %v1422
        %v1424 = vpop.f32.mrb[0].mxu0
        %1425 = vdwg.mxu0
        %v1426 = vsel %vm1056, %v1420, -inf
        %1427 = vmax.xlane.f32.xlu0 %v1426
        %v1428 = vpop.xlane.xlu0 %1427
        %v1429 = vsel %vm1056, %v1423, -inf
        %1430 = vmax.xlane.f32.xlu0 %v1429
        %v1431 = vpop.xlane.xlu0 %1430
        %v1432 = vsub.f32 %v1420, %v1428
        %v1433 = vsub.f32 %v1423, %v1431
        %v1434 = vmul.f32 %v1432, 1.442695
        %v1435 = vpow.pop %v1434
        %v1436 = vmul.f32 %v1433, 1.442695
        %v1437 = vpow.pop %v1436
        %v1438 = vsel %vm1056, %v1435, 0.0
        %1439 = vadd.xlane.f32.xlu0 %v1438
        %v1440 = vpop.xlane.xlu0 %1439
        %v1441 = vsel %vm1056, %v1437, 0.0
        %1442 = vadd.xlane.f32.xlu0 %v1441
        %v1443 = vpop.xlane.xlu0 %1442
        %v1444 = vrcp.pop %v1440
        %v1445 = vrcp.pop %v1443
        %v1446 = vmul.f32 %v1435, %v1444
        %v1447 = vmul.f32 %v1437, %v1445
        %v1448 = vpack.c.bf16 %v1447, %v1446
        %1449 = vrot.lane.b32.xlu0 %v1373, 40
        %v1450 = vpop.permute.xlu0 %1449
        %v1453 = vsel %vm1056, %v1448, 0
        %1455 = vmatprep.subr.bf16.mxu0 0
        %1456 = vmatpush1.bf16.msra.mxu0 %v1450
        %1457 = vmatprep.subr.bf16.mxu0 0
        %1458 = vmatpush1.bf16.msra.mxu0 0
        %1459 = vmatprep.subr.bf16.mxu0 0
        %1460 = vmatpush1.bf16.msra.mxu0 0
        %1461 = vmatprep.subr.bf16.mxu0 0
        %1462 = vmatpush1.bf16.msra.mxu0 0
        %1463 = vmatprep.subr.bf16.mxu0 0
        %1464 = vmatpush1.bf16.msra.mxu0 0
        %1465 = vmatprep.subr.bf16.mxu0 0
        %1466 = vmatpush1.bf16.msra.mxu0 0
        %1467 = vmatprep.subr.bf16.mxu0 0
        %1468 = vmatpush1.bf16.msra.mxu0 0
        %1469 = vmatprep.subr.bf16.mxu0 0
        %1470 = vmatpush1.bf16.msra.mxu0 0
        %1471 = vmatprep.subr.bf16.mxu0 0
        %1472 = vmatpush1.bf16.msra.mxu0 0
        %1473 = vmatprep.subr.bf16.mxu0 0
        %1474 = vmatpush1.bf16.msra.mxu0 0
        %1475 = vmatprep.subr.bf16.mxu0 0
        %1476 = vmatpush1.bf16.msra.mxu0 0
        %1477 = vmatprep.subr.bf16.mxu0 0
        %1478 = vmatpush1.bf16.msra.mxu0 0
        %1479 = vmatprep.subr.bf16.mxu0 0
        %1480 = vmatpush1.bf16.msra.mxu0 0
        %1481 = vmatprep.subr.bf16.mxu0 0
        %1482 = vmatpush1.bf16.msra.mxu0 0
        %1483 = vmatprep.subr.bf16.mxu0 0
        %1484 = vmatpush1.bf16.msra.mxu0 0
        %1485 = vmatprep.subr.bf16.mxu0 0
        %1486 = vmatpush1.bf16.msra.mxu0 0
        %1487 = vmatprep.mubr.bf16.mxu0 0
        %1488 = vmatmul.mubr.bf16.gmra.mrb[0].mxu0 %v1453
        %v1489 = vpop.f32.mrb[0].mxu0
        %v1490 = vadd.f32 0.0, %v1489
        %v1491 = vpop.f32.mrb[0].mxu0
        %v1492 = vpop.f32.mrb[0].mxu0
        %v1493 = vadd.f32 0.0, %v1492
        %v1494 = vpop.f32.mrb[0].mxu0
        %1495 = vdwg.mxu0
        %1498 = vrot.lane.b32.xlu0 %v1244, 8
        %v1499 = vpop.permute.xlu0 %1498
        %1500 = vrot.lane.b32.xlu0 %v1247, 8
        %v1501 = vpop.permute.xlu0 %1500
        %1506 = vrot.lane.b32.xlu0 %v1367, 16
        %v1507 = vpop.permute.xlu0 %1506
        %1508 = vrot.lane.b32.xlu0 %v1370, 16
        %v1509 = vpop.permute.xlu0 %1508
        %1514 = vrot.lane.b32.xlu0 %v1490, 24
        %v1515 = vpop.permute.xlu0 %1514
        %1516 = vrot.lane.b32.xlu0 %v1493, 24
        %v1517 = vpop.permute.xlu0 %1516
        %v1520 = vsel %vm1008, %v1121, %v1499
        %v1521 = vsel %vm1008, %v1124, %v1501
        %v1522 = vsel %vm1056, %v1520, %v1507
        %v1523 = vsel %vm1056, %v1521, %v1509
        %vm1524 = vcmask 195584
        %v1525 = vsel %vm1524, %v1522, %v1515
        %v1526 = vsel %vm1524, %v1523, %v1517
        %v1527 = vpack.c.bf16 %v1526, %v1525
        %v1528 = vld [vmem:[%s715] sm:$0xf]
        %v1529 = vld [vmem:[%s715 + $0x4] sm:$0xf]
        %v1530 = vld [vmem:[%s715 + $0x8] sm:$0xf]
        %v1531 = vld [vmem:[%s715 + $0xc] sm:$0xf]
        %v1532 = vld [vmem:[%s723] sm:$0x1]
        %v1534 = vlaneseq
        %v1535 = vshrl.u32 %v1534, 7
        %v1536 = vsub.s32 0, %v1535
        %v1537 = vrot.slane %v1532, %v1536
        %v1543 = vunpack.c.l.b16 %v1528
        %v1544 = vunpack.c.l.b16 %v1529
        %v1545 = vunpack.c.l.b16 %v1530
        %v1546 = vunpack.c.l.b16 %v1531
        %v1547 = vpack.c.b16 %v1544, %v1543
        %v1548 = vpack.c.b16 %v1546, %v1545
        %v1552 = vsel %vm885, %v1527, 0
        %1554 = vmatprep.subr.bf16.mxu0 0
        %1555 = vmatpush1.bf16.msra.mxu0 %v1547
        %1556 = vmatprep.subr.bf16.mxu0 0
        %1557 = vmatpush1.bf16.msra.mxu0 %v1548
        %1558 = vmatprep.subr.bf16.mxu0 0
        %1559 = vmatpush1.bf16.msra.mxu0 0
        %1560 = vmatprep.subr.bf16.mxu0 0
        %1561 = vmatpush1.bf16.msra.mxu0 0
        %1562 = vmatprep.subr.bf16.mxu0 0
        %1563 = vmatpush1.bf16.msra.mxu0 0
        %1564 = vmatprep.subr.bf16.mxu0 0
        %1565 = vmatpush1.bf16.msra.mxu0 0
        %1566 = vmatprep.subr.bf16.mxu0 0
        %1567 = vmatpush1.bf16.msra.mxu0 0
        %1568 = vmatprep.subr.bf16.mxu0 0
        %1569 = vmatpush1.bf16.msra.mxu0 0
        %1570 = vmatprep.subr.bf16.mxu0 0
        %1571 = vmatpush1.bf16.msra.mxu0 0
        %1572 = vmatprep.subr.bf16.mxu0 0
        %1573 = vmatpush1.bf16.msra.mxu0 0
        %1574 = vmatprep.subr.bf16.mxu0 0
        %1575 = vmatpush1.bf16.msra.mxu0 0
        %1576 = vmatprep.subr.bf16.mxu0 0
        %1577 = vmatpush1.bf16.msra.mxu0 0
        %1578 = vmatprep.subr.bf16.mxu0 0
        %1579 = vmatpush1.bf16.msra.mxu0 0
        %1580 = vmatprep.subr.bf16.mxu0 0
        %1581 = vmatpush1.bf16.msra.mxu0 0
        %1582 = vmatprep.subr.bf16.mxu0 0
        %1583 = vmatpush1.bf16.msra.mxu0 0
        %1584 = vmatprep.subr.bf16.mxu0 0
        %1585 = vmatpush1.bf16.msra.mxu0 0
        %1586 = vmatprep.mubr.bf16.mxu0 0
        %1587 = vmatmul.mubr.bf16.gmra.mrb[0].mxu0 %v1552
        %v1588 = vpop.f32.mrb[0].mxu0
        %v1589 = vadd.f32 %v1537, %v1588
        %v1590 = vpop.f32.mrb[0].mxu0
        %v1591 = vpop.f32.mrb[0].mxu0
        %v1592 = vadd.f32 %v1537, %v1591
        %v1593 = vpop.f32.mrb[0].mxu0
        %1594 = vdwg.mxu0
        %v1595 = vadd.f32 %v1000, %v1589
        %v1596 = vadd.f32 %v1001, %v1592
        %v1597 = vld [vmem:[%s731] sm:$0x1]
        %v1598 = vld [vmem:[%s739] sm:$0x1]
        %v1599 = vsel %vm885, %v1595, 0.0
        %1600 = vadd.xlane.f32.xlu0 %v1599
        %v1601 = vpop.xlane.xlu0 %1600
        %v1602 = vsel %vm885, %v1596, 0.0
        %1603 = vadd.xlane.f32.xlu0 %v1602
        %v1604 = vpop.xlane.xlu0 %1603
        %v1605 = vmul.f32 %v1601, %v892
        %v1606 = vmul.f32 %v1604, %v892
        %v1607 = vsub.f32 %v1595, %v1605
        %v1608 = vsub.f32 %v1596, %v1606
        %v1609 = vmul.f32 %v1607, %v1607
        %v1610 = vmul.f32 %v1608, %v1608
        %v1611 = vsel %vm885, %v1609, 0.0
        %1612 = vadd.xlane.f32.xlu0 %v1611
        %v1613 = vpop.xlane.xlu0 %1612
        %v1614 = vsel %vm885, %v1610, 0.0
        %1615 = vadd.xlane.f32.xlu0 %v1614
        %v1616 = vpop.xlane.xlu0 %1615
        %v1617 = vmul.f32 %v1613, %v892
        %v1618 = vmul.f32 %v1616, %v892
        %v1619 = vadd.f32 %v1617, 1e-05
        %v1620 = vadd.f32 %v1618, 1e-05
        %v1621 = vrsqrt.pop %v1619
        %v1622 = vrsqrt.pop %v1620
        %v1623 = vmul.f32 %v1607, %v1621
        %v1624 = vmul.f32 %v1608, %v1622
        %v1626 = vlaneseq
        %v1627 = vshrl.u32 %v1626, 7
        %v1628 = vsub.s32 0, %v1627
        %v1629 = vrot.slane %v1597, %v1628
        %v1631 = vmul.f32 %v1623, %v1629
        %v1632 = vmul.f32 %v1624, %v1629
        %v1634 = vlaneseq
        %v1635 = vshrl.u32 %v1634, 7
        %v1636 = vsub.s32 0, %v1635
        %v1637 = vrot.slane %v1598, %v1636
        %v1639 = vadd.f32 %v1631, %v1637
        %v1640 = vadd.f32 %v1632, %v1637
        %v1641 = vpack.c.bf16 %v1640, %v1639
        %v1642 = vld [vmem:[%s748] sm:$0xf]
        %v1643 = vld [vmem:[%s748 + $0x4] sm:$0xf]
        %v1644 = vld [vmem:[%s748 + $0x8] sm:$0xf]
        %v1645 = vld [vmem:[%s748 + $0xc] sm:$0xf]
        %v1646 = vld [vmem:[%s756] sm:$0x1]
        %v1648 = vlaneseq
        %v1649 = vshrl.u32 %v1648, 7
        %v1650 = vsub.s32 0, %v1649
        %v1651 = vrot.slane %v1646, %v1650
        %v1657 = vunpack.c.l.b16 %v1642
        %v1658 = vunpack.c.l.b16 %v1643
        %v1659 = vunpack.c.l.b16 %v1644
        %v1660 = vunpack.c.l.b16 %v1645
        %v1661 = vpack.c.b16 %v1658, %v1657
        %v1662 = vpack.c.b16 %v1660, %v1659
        %v1666 = vsel %vm885, %v1641, 0
        %1668 = vmatprep.subr.bf16.mxu0 0
        %1669 = vmatpush1.bf16.msra.mxu0 %v1661
        %1670 = vmatprep.subr.bf16.mxu0 0
        %1671 = vmatpush1.bf16.msra.mxu0 %v1662
        %1672 = vmatprep.subr.bf16.mxu0 0
        %1673 = vmatpush1.bf16.msra.mxu0 0
        %1674 = vmatprep.subr.bf16.mxu0 0
        %1675 = vmatpush1.bf16.msra.mxu0 0
        %1676 = vmatprep.subr.bf16.mxu0 0
        %1677 = vmatpush1.bf16.msra.mxu0 0
        %1678 = vmatprep.subr.bf16.mxu0 0
        %1679 = vmatpush1.bf16.msra.mxu0 0
        %1680 = vmatprep.subr.bf16.mxu0 0
        %1681 = vmatpush1.bf16.msra.mxu0 0
        %1682 = vmatprep.subr.bf16.mxu0 0
        %1683 = vmatpush1.bf16.msra.mxu0 0
        %1684 = vmatprep.subr.bf16.mxu0 0
        %1685 = vmatpush1.bf16.msra.mxu0 0
        %1686 = vmatprep.subr.bf16.mxu0 0
        %1687 = vmatpush1.bf16.msra.mxu0 0
        %1688 = vmatprep.subr.bf16.mxu0 0
        %1689 = vmatpush1.bf16.msra.mxu0 0
        %1690 = vmatprep.subr.bf16.mxu0 0
        %1691 = vmatpush1.bf16.msra.mxu0 0
        %1692 = vmatprep.subr.bf16.mxu0 0
        %1693 = vmatpush1.bf16.msra.mxu0 0
        %1694 = vmatprep.subr.bf16.mxu0 0
        %1695 = vmatpush1.bf16.msra.mxu0 0
        %1696 = vmatprep.subr.bf16.mxu0 0
        %1697 = vmatpush1.bf16.msra.mxu0 0
        %1698 = vmatprep.subr.bf16.mxu0 0
        %1699 = vmatpush1.bf16.msra.mxu0 0
        %1700 = vmatprep.mubr.bf16.mxu0 0
        %1701 = vmatmul.mubr.bf16.gmra.mrb[0].mxu0 %v1666
        %v1702 = vpop.f32.mrb[0].mxu0
        %v1703 = vadd.f32 %v1651, %v1702
        %v1704 = vpop.f32.mrb[0].mxu0
        %v1705 = vpop.f32.mrb[0].mxu0
        %v1706 = vadd.f32 %v1651, %v1705
        %v1707 = vpop.f32.mrb[0].mxu0
        %1708 = vdwg.mxu0
        %v1709 = vmul.f32 %v1703, 0.5
        %v1710 = vmul.f32 %v1706, 0.5
        %v1711 = vmul.f32 %v1703, 0.044715
        %v1712 = vmul.f32 %v1706, 0.044715
        %v1713 = vmul.f32 %v1711, %v1703
        %v1714 = vmul.f32 %v1712, %v1706
        %v1715 = vmul.f32 %v1713, %v1703
        %v1716 = vmul.f32 %v1714, %v1706
        %v1717 = vadd.f32 %v1703, %v1715
        %v1718 = vadd.f32 %v1706, %v1716
        %v1719 = vmul.f32 %v1717, 0.7978846
        %v1720 = vmul.f32 %v1718, 0.7978846
        %v1721 = vtanh.pop %v1719
        %v1722 = vtanh.pop %v1720
        %v1723 = vadd.f32 %v1721, 1.0
        %v1724 = vadd.f32 %v1722, 1.0
        %v1725 = vmul.f32 %v1709, %v1723
        %v1726 = vmul.f32 %v1710, %v1724
        %v1727 = vpack.c.bf16 %v1726, %v1725
        %v1728 = vld [vmem:[%s765] sm:$0xf]
        %v1729 = vld [vmem:[%s765 + $0x4] sm:$0xf]
        %v1730 = vld [vmem:[%s765 + $0x8] sm:$0xf]
        %v1731 = vld [vmem:[%s765 + $0xc] sm:$0xf]
        %v1732 = vld [vmem:[%s773] sm:$0x1]
        %v1734 = vlaneseq
        %v1735 = vshrl.u32 %v1734, 7
        %v1736 = vsub.s32 0, %v1735
        %v1737 = vrot.slane %v1732, %v1736
        %v1743 = vunpack.c.l.b16 %v1728
        %v1744 = vunpack.c.l.b16 %v1729
        %v1745 = vunpack.c.l.b16 %v1730
        %v1746 = vunpack.c.l.b16 %v1731
        %v1747 = vpack.c.b16 %v1744, %v1743
        %v1748 = vpack.c.b16 %v1746, %v1745
        %v1752 = vsel %vm885, %v1727, 0
        %1754 = vmatprep.subr.bf16.mxu0 0
        %1755 = vmatpush1.bf16.msra.mxu0 %v1747
        %1756 = vmatprep.subr.bf16.mxu0 0
        %1757 = vmatpush1.bf16.msra.mxu0 %v1748
        %1758 = vmatprep.subr.bf16.mxu0 0
        %1759 = vmatpush1.bf16.msra.mxu0 0
        %1760 = vmatprep.subr.bf16.mxu0 0
        %1761 = vmatpush1.bf16.msra.mxu0 0
        %1762 = vmatprep.subr.bf16.mxu0 0
        %1763 = vmatpush1.bf16.msra.mxu0 0
        %1764 = vmatprep.subr.bf16.mxu0 0
        %1765 = vmatpush1.bf16.msra.mxu0 0
        %1766 = vmatprep.subr.bf16.mxu0 0
        %1767 = vmatpush1.bf16.msra.mxu0 0
        %1768 = vmatprep.subr.bf16.mxu0 0
        %1769 = vmatpush1.bf16.msra.mxu0 0
        %1770 = vmatprep.subr.bf16.mxu0 0
        %1771 = vmatpush1.bf16.msra.mxu0 0
        %1772 = vmatprep.subr.bf16.mxu0 0
        %1773 = vmatpush1.bf16.msra.mxu0 0
        %1774 = vmatprep.subr.bf16.mxu0 0
        %1775 = vmatpush1.bf16.msra.mxu0 0
        %1776 = vmatprep.subr.bf16.mxu0 0
        %1777 = vmatpush1.bf16.msra.mxu0 0
        %1778 = vmatprep.subr.bf16.mxu0 0
        %1779 = vmatpush1.bf16.msra.mxu0 0
        %1780 = vmatprep.subr.bf16.mxu0 0
        %1781 = vmatpush1.bf16.msra.mxu0 0
        %1782 = vmatprep.subr.bf16.mxu0 0
        %1783 = vmatpush1.bf16.msra.mxu0 0
        %1784 = vmatprep.subr.bf16.mxu0 0
        %1785 = vmatpush1.bf16.msra.mxu0 0
        %1786 = vmatprep.mubr.bf16.mxu0 0
        %1787 = vmatmul.mubr.bf16.gmra.mrb[0].mxu0 %v1752
        %v1788 = vpop.f32.mrb[0].mxu0
        %v1789 = vadd.f32 %v1737, %v1788
        %v1790 = vpop.f32.mrb[0].mxu0
        %v1791 = vpop.f32.mrb[0].mxu0
        %v1792 = vadd.f32 %v1737, %v1791
        %v1793 = vpop.f32.mrb[0].mxu0
        %1794 = vdwg.mxu0
        %v1795 = vadd.f32 %v1595, %v1789
        %v1796 = vadd.f32 %v1596, %v1792
        %1797 = vst.msk [vmem:[#allocation21] sm:$0xff] %vm885, %v1795
        %1798 = vst.msk [vmem:[#allocation21 + $0x8] sm:$0xff] %vm885, %v1796
        // Predicated region
        $region137: #{tpu_custom_call.1} parent=75 // pred_check
          %p1799 = pneg %p395
        $region138: #{tpu_custom_call.1} parent=75 // pred_check_branch
          %1801 = sbr.rel (%p1799) target = $region140
        $region139: #{tpu_custom_call.1} parent=75 // pred_region
          %s1803 = ssub.s32 256, 256
          %1804 = vsyncadd [#allocation6], %s1803
          %s1805 = sshll.u32 [#allocation21], 4
          %s1806 = int_to_ptr.vmem [resolvable:$true] %s1805
          %1811 = dma.vmem_to_hbm [thread:$0]  %s1806, 256, %s14, [#allocation6], 128, 128, 8
        $region140: #{tpu_custom_call.1} parent=75 // pred_fallthru
          _
        // Predicated region
        $region141: #{tpu_custom_call.1} parent=75 // pred_check
          %p1812 = pneg %p395
        $region142: #{tpu_custom_call.1} parent=75 // pred_check_branch
          %1814 = sbr.rel (%p1812) target = $region144
        $region143: #{tpu_custom_call.1} parent=75 // pred_region
          %1815 = dma.done [#allocation6], 256
        $region144: #{tpu_custom_call.1} parent=75 // pred_fallthru
          _
      $region76: #{tpu_custom_call.1} parent=5 // pred_fallthru
        _
      %p1816 = scmp.le.s32.totalorder 2, %s23
      // Predicated region
      $region145: #{tpu_custom_call.1} parent=5 // pred_check
        %p1817 = pneg %p1816
      $region146: #{tpu_custom_call.1} parent=5 // pred_check_branch
        %1819 = sbr.rel (%p1817) target = $region148
      $region147: #{tpu_custom_call.1} parent=5 // pred_region
        %s1820 = ssub.s32 %s23, 2
      $region148: #{tpu_custom_call.1} parent=5 // pred_fallthru
        _
    $region6: #{tpu_custom_call.1} parent=1 // loop_footer
      %s27 = sadd.s32 1, %s23
    $region7: #{tpu_custom_call.1} parent=1 // loop_footer_branch
      %22 = sbr.rel target = $region3
    $region8: #{tpu_custom_call.1} parent=1 // loop_exit
      _
    %1821 = vsyncpa [#allocation5], 1
    %s1822 = scalar_lea.sflag [#allocation5], 1
    %1823 = vsyncpa %s1822, 1
    %1824 = vsyncpa [#allocation8], 1
    %1825 = vsyncpa [#allocation6], 1
    %s1826 = scalar_lea.sflag [#allocation6], 1
    %1827 = vsyncpa %s1826, 1

</llo_original>
